<compile_context>
chip_gen: v7x
topology: tpu7x:2x2x1
jax: 0.10.0
libtpu: 0.0.40
codegen_flags: <defaults>
</compile_context>

<pallas_src>
import functools

import jax
import jax.numpy as jnp
from jax.experimental import pallas as pl
from jax.experimental.pallas import tpu as pltpu

BN_EPS = 1e-5


# ---------------- in-kernel helpers ----------------

def _bn_over_rows(z, gamma, beta, m):
    # Training-mode BatchNorm, stats over rows (axis 0 = N*H*W), single pass.
    # z: (M, C), gamma/beta: (1, C).
    s = jnp.sum(z, axis=0, keepdims=True)
    ss = jnp.sum(z * z, axis=0, keepdims=True)
    mean = s * (1.0 / m)
    var = ss * (1.0 / m) - mean * mean
    return (z - mean) * jax.lax.rsqrt(var + BN_EPS) * gamma + beta


def _bn_over_cols(z, gamma, beta, m):
    # Same BN but for the transposed (C, M) layout: stats over lanes (axis 1).
    # z: (C, M), gamma/beta: (C, 1).
    s = jnp.sum(z, axis=1, keepdims=True)
    ss = jnp.sum(z * z, axis=1, keepdims=True)
    mean = s * (1.0 / m)
    var = ss * (1.0 / m) - mean * mean
    return (z - mean) * jax.lax.rsqrt(var + BN_EPS) * gamma + beta


# ---------------- fused Pallas kernel ----------------

def bottleneck_fused_kernel(x2d_ref, xres_ref, w1_ref, g1_ref, b1_ref,
                            w9_ref, g2_ref, b2_ref, w3_ref, g3_ref, b3_ref,
                            o_ref, ypad_ref, xcol_ref, *, N, H, W, C1):
    M = N * H * W
    bf16 = jnp.bfloat16

    # ---- conv1 (1x1) + bn1 + relu : channels-last (M, C1) ----
    z1 = jnp.dot(x2d_ref[...].astype(bf16), w1_ref[...],
                 preferred_element_type=jnp.float32)
    y1 = jnp.maximum(_bn_over_rows(z1, g1_ref[...], b1_ref[...], M), 0.0)

    # ---- grouped conv2 (3x3, stride=1, pad=1) as ONE im2col matmul ----
    # zero-padded activation slab held in VMEM scratch
    ypad_ref[...] = jnp.zeros_like(ypad_ref)
    ypad_ref[:, 1:H + 1, 1:W + 1, :] = y1.reshape(N, H, W, C1)
    # pack the 9 shifted views side by side -> (M, 9*C1) column matrix
    for kh in range(3):
        for kw in range(3):
            t = kh * 3 + kw
            xcol_ref[:, t * C1:(t + 1) * C1] = (
                ypad_ref[:, kh:kh + H, kw:kw + W, :].reshape(M, C1))
    z2 = jnp.dot(xcol_ref[...].astype(bf16), w9_ref[...],
                 preferred_element_type=jnp.float32)
    y2 = jnp.maximum(_bn_over_rows(z2, g2_ref[...], b2_ref[...], M), 0.0)

    # ---- conv3 (1x1) + bn3 + residual + relu, transposed -> (C3, M) ----
    # dot_general with rhs-contraction on dim 1 gives a lane-dense (C3, M) result
    z3t = jax.lax.dot_general(
        w3_ref[...], y2.astype(bf16),
        dimension_numbers=(((1,), (1,)), ((), ())),
        preferred_element_type=jnp.float32)                       # (C3, M)
    out = _bn_over_cols(z3t, g3_ref[...], b3_ref[...], M) + xres_ref[...]
    o_ref[...] = jnp.maximum(out, 0.0)


# ---------------- wrapper ----------------

def _full_spec(shape):
    ndim = len(shape)
    return pl.BlockSpec(shape, lambda i, _n=ndim: (0,) * _n)


def bottleneck_forward(x_nchw, params, *, num_group=32):
    """ResNeXt Bottleneck forward (stride=1, downsample=None)."""
    w1, g1, b1, w2, g2, b2, w3, g3, b3 = params
    N, Cin, H, W = x_nchw.shape
    C1 = w1.shape[0]                 # planes * 2
    C3 = w3.shape[0]                 # planes * 4 (== Cin: downsample is None)
    assert C3 == Cin
    M = N * H * W
    bf16 = jnp.bfloat16

    x = x_nchw.astype(jnp.float32)
    x2d = jnp.transpose(x, (0, 2, 3, 1)).reshape(M, Cin)        # (M, Cin)
    xres_t = jnp.transpose(x, (1, 0, 2, 3)).reshape(Cin, M)     # (C3, M) residual

    # conv1 weight: (C1, Cin, 1, 1) -> (Cin, C1)
    w1m = jnp.transpose(w1.reshape(C1, Cin)).astype(bf16)
    # grouped conv2 weight -> dense block-diagonal per-tap -> (9*C1, C1)
    G = num_group
    Cg = C1 // G
    w2g = jnp.transpose(w2.reshape(G, Cg, Cg, 3, 3), (3, 4, 0, 2, 1))  # (3,3,G,i,o)
    dense = jnp.einsum('khgio,gf->khgifo', w2g, jnp.eye(G, dtype=w2.dtype))
    w9 = dense.reshape(9 * C1, C1).astype(bf16)
    # conv3 weight used directly as (C3, C1) LHS of an rhs-transposed matmul
    w3m = w3.reshape(C3, C1).astype(bf16)

    g1r = g1.reshape(1, C1).astype(jnp.float32)
    b1r = b1.reshape(1, C1).astype(jnp.float32)
    g2r = g2.reshape(1, C1).astype(jnp.float32)
    b2r = b2.reshape(1, C1).astype(jnp.float32)
    g3r = g3.reshape(C3, 1).astype(jnp.float32)
    b3r = b3.reshape(C3, 1).astype(jnp.float32)

    args = (x2d, xres_t, w1m, g1r, b1r, w9, g2r, b2r, w3m, g3r, b3r)

    flops = 2 * M * (Cin * C1 + 9 * C1 * C1 + C1 * C3)
    bytes_accessed = sum(int(a.size) * a.dtype.itemsize for a in args) + 4 * C3 * M
    cost = pl.CostEstimate(flops=flops, transcendentals=2 * C1 + C3,
                           bytes_accessed=bytes_accessed)

    kernel = functools.partial(bottleneck_fused_kernel, N=N, H=H, W=W, C1=C1)
    out_t = pl.pallas_call(
        kernel,
        out_shape=jax.ShapeDtypeStruct((C3, M), jnp.float32),
        grid=(1,),
        in_specs=[_full_spec(a.shape) for a in args],
        out_specs=_full_spec((C3, M)),
        scratch_shapes=[
            pltpu.VMEM((N, H + 2, W + 2, C1), jnp.float32),   # zero-padded y1 slab
            pltpu.VMEM((M, 9 * C1), jnp.float32),             # im2col column matrix
        ],
        compiler_params=pltpu.CompilerParams(
            dimension_semantics=("arbitrary",),
            vmem_limit_bytes=32 * 1024 * 1024),
        cost_estimate=cost,
    )(*args)

    # (C3, N*H*W) lane-dense kernel output -> NCHW
    return jnp.transpose(out_t.reshape(C3, N, H, W), (1, 0, 2, 3))


# ---------------- pure-JAX reference (for sanity check) ----------------

def bottleneck_reference(x, params, *, num_group=32):
    w1, g1, b1, w2, g2, b2, w3, g3, b3 = params

    def bn(y, gamma, beta):
        mean = jnp.mean(y, axis=(0, 2, 3), keepdims=True)
        var = jnp.mean((y - mean) ** 2, axis=(0, 2, 3), keepdims=True)
        yhat = (y - mean) * jax.lax.rsqrt(var + BN_EPS)
        return yhat * gamma.reshape(1, -1, 1, 1) + beta.reshape(1, -1, 1, 1)

    dn = ('NCHW', 'OIHW', 'NCHW')
    y = jax.lax.conv_general_dilated(x, w1, (1, 1), 'VALID', dimension_numbers=dn)
    y = jnp.maximum(bn(y, g1, b1), 0.0)
    y = jax.lax.conv_general_dilated(y, w2, (1, 1), ((1, 1), (1, 1)),
                                     dimension_numbers=dn,
                                     feature_group_count=num_group)
    y = jnp.maximum(bn(y, g2, b2), 0.0)
    y = jax.lax.conv_general_dilated(y, w3, (1, 1), 'VALID', dimension_numbers=dn)
    y = bn(y, g3, b3) + x
    return jnp.maximum(y, 0.0)


if __name__ == "__main__":
    # Small but faithful shapes: num_group=32 requires planes*2 % 32 == 0.
    planes = 16
    num_group = 32
    inplanes = planes * 4          # downsample=None, stride=1 -> residual matches
    N, H, W = 2, 8, 8              # M = N*H*W = 128 -> lane-dense output store

    key = jax.random.PRNGKey(0)
    ks = jax.random.split(key, 10)
    w1 = 0.1 * jax.random.normal(ks[0], (planes * 2, inplanes, 1, 1), jnp.float32)
    g1 = 1.0 + 0.1 * jax.random.normal(ks[1], (planes * 2,), jnp.float32)
    b1 = 0.1 * jax.random.normal(ks[2], (planes * 2,), jnp.float32)
    w2 = 0.1 * jax.random.normal(ks[3], (planes * 2, (planes * 2) // num_group, 3, 3),
                                 jnp.float32)
    g2 = 1.0 + 0.1 * jax.random.normal(ks[4], (planes * 2,), jnp.float32)
    b2 = 0.1 * jax.random.normal(ks[5], (planes * 2,), jnp.float32)
    w3 = 0.1 * jax.random.normal(ks[6], (planes * 4, planes * 2, 1, 1), jnp.float32)
    g3 = 1.0 + 0.1 * jax.random.normal(ks[7], (planes * 4,), jnp.float32)
    b3 = 0.1 * jax.random.normal(ks[8], (planes * 4,), jnp.float32)
    params = (w1, g1, b1, w2, g2, b2, w3, g3, b3)

    x = jax.random.normal(ks[9], (N, inplanes, H, W), jnp.float32)  # NCHW like PyTorch

    out = jax.block_until_ready(bottleneck_forward(x, params, num_group=num_group))
    ref = jax.block_until_ready(bottleneck_reference(x, params, num_group=num_group))

    assert out.shape == (N, planes * 4, H, W), out.shape
    # bf16 MXU operands (per perf review) -> slightly wider atol than the f32 version;
    # accumulation, BN and the residual path are still f32.
    assert jnp.allclose(out, ref, rtol=2e-2, atol=4e-2), \
        float(jnp.max(jnp.abs(out - ref)))
    # TODO(synk): BatchNorm running_mean/running_var bookkeeping (training-time
    # state update) is not modeled; it does not affect the forward output.
    print("KERNEL_OK")
</pallas_src>

<mosaic_0001>
module attributes {stable_mosaic.version = 11 : i64} {
  func.func @bottleneck_fused_kernel(%arg0: i32, %arg1: memref<128x64xf32, #tpu.memory_space<vmem>>, %arg2: memref<64x128xf32, #tpu.memory_space<vmem>>, %arg3: memref<64x32xbf16, #tpu.memory_space<vmem>>, %arg4: memref<1x32xf32, #tpu.memory_space<vmem>>, %arg5: memref<1x32xf32, #tpu.memory_space<vmem>>, %arg6: memref<288x32xbf16, #tpu.memory_space<vmem>>, %arg7: memref<1x32xf32, #tpu.memory_space<vmem>>, %arg8: memref<1x32xf32, #tpu.memory_space<vmem>>, %arg9: memref<64x32xbf16, #tpu.memory_space<vmem>>, %arg10: memref<64x1xf32, #tpu.memory_space<vmem>>, %arg11: memref<64x1xf32, #tpu.memory_space<vmem>>, %arg12: memref<64x128xf32, #tpu.memory_space<vmem>>, %arg13: memref<2x10x10x32xf32, #tpu.memory_space<vmem>>, %arg14: memref<128x288xf32, #tpu.memory_space<vmem>>) attributes {dimension_semantics = [#tpu.dimension_semantics<arbitrary>], iteration_bounds = array<i64: 1>, scalar_prefetch = 0 : i64, scratch_operands = 2 : i64, tpu.core_type = #tpu.core_type<tc>, window_params = [{pipeline_mode = #tpu.pipeline_mode<synchronous>, transform_indices = @transform_0, window_bounds = array<i64: 128, 64>}, {pipeline_mode = #tpu.pipeline_mode<synchronous>, transform_indices = @transform_1, window_bounds = array<i64: 64, 128>}, {pipeline_mode = #tpu.pipeline_mode<synchronous>, transform_indices = @transform_2, window_bounds = array<i64: 64, 32>}, {pipeline_mode = #tpu.pipeline_mode<synchronous>, transform_indices = @transform_3, window_bounds = array<i64: 1, 32>}, {pipeline_mode = #tpu.pipeline_mode<synchronous>, transform_indices = @transform_4, window_bounds = array<i64: 1, 32>}, {pipeline_mode = #tpu.pipeline_mode<synchronous>, transform_indices = @transform_5, window_bounds = array<i64: 288, 32>}, {pipeline_mode = #tpu.pipeline_mode<synchronous>, transform_indices = @transform_6, window_bounds = array<i64: 1, 32>}, {pipeline_mode = #tpu.pipeline_mode<synchronous>, transform_indices = @transform_7, window_bounds = array<i64: 1, 32>}, {pipeline_mode = #tpu.pipeline_mode<synchronous>, transform_indices = @transform_8, window_bounds = array<i64: 64, 32>}, {pipeline_mode = #tpu.pipeline_mode<synchronous>, transform_indices = @transform_9, window_bounds = array<i64: 64, 1>}, {pipeline_mode = #tpu.pipeline_mode<synchronous>, transform_indices = @transform_10, window_bounds = array<i64: 64, 1>}, {pipeline_mode = #tpu.pipeline_mode<synchronous>, transform_indices = @transform_11, window_bounds = array<i64: 64, 128>}]} {
    %c0 = arith.constant 0 : index
    %c0_0 = arith.constant 0 : index
    %0 = vector.load %arg1[%c0, %c0_0] : memref<128x64xf32, #tpu.memory_space<vmem>>, vector<128x64xf32>
    %1 = arith.truncf %0 : vector<128x64xf32> to vector<128x64xbf16>
    %c0_1 = arith.constant 0 : index
    %c0_2 = arith.constant 0 : index
    %2 = vector.load %arg3[%c0_1, %c0_2] : memref<64x32xbf16, #tpu.memory_space<vmem>>, vector<64x32xbf16>
    %cst = arith.constant dense<0.000000e+00> : vector<128x32xf32>
    %3 = tpu.matmul %1, %2, %cst {dimension_numbers = #tpu.dot_dimension_numbers<[1], [0], [0], [1], [0, 0, 1, 1], [], []>} : vector<128x64xbf16>, vector<64x32xbf16>, vector<128x32xf32> -> vector<128x32xf32>
    %c0_3 = arith.constant 0 : index
    %c0_4 = arith.constant 0 : index
    %4 = vector.load %arg4[%c0_3, %c0_4] : memref<1x32xf32, #tpu.memory_space<vmem>>, vector<1x32xf32>
    %c0_5 = arith.constant 0 : index
    %c0_6 = arith.constant 0 : index
    %5 = vector.load %arg5[%c0_5, %c0_6] : memref<1x32xf32, #tpu.memory_space<vmem>>, vector<1x32xf32>
    %cst_7 = arith.constant dense<0.000000e+00> : vector<32xf32>
    %6 = vector.multi_reduction <add>, %3, %cst_7 [0] : vector<128x32xf32> to vector<32xf32>
    %7 = vector.shape_cast %6 : vector<32xf32> to vector<1x32xf32>
    %8 = arith.mulf %3, %3 : vector<128x32xf32>
    %cst_8 = arith.constant dense<0.000000e+00> : vector<32xf32>
    %9 = vector.multi_reduction <add>, %8, %cst_8 [0] : vector<128x32xf32> to vector<32xf32>
    %10 = vector.shape_cast %9 : vector<32xf32> to vector<1x32xf32>
    %cst_9 = arith.constant 7.812500e-03 : f32
    %11 = vector.broadcast %cst_9 : f32 to vector<1x32xf32>
    %12 = arith.mulf %7, %11 : vector<1x32xf32>
    %cst_10 = arith.constant 7.812500e-03 : f32
    %13 = vector.broadcast %cst_10 : f32 to vector<1x32xf32>
    %14 = arith.mulf %10, %13 : vector<1x32xf32>
    %15 = arith.mulf %12, %12 : vector<1x32xf32>
    %16 = arith.subf %14, %15 : vector<1x32xf32>
    %17 = vector.broadcast %12 : vector<1x32xf32> to vector<128x32xf32>
    %18 = arith.subf %3, %17 : vector<128x32xf32>
    %cst_11 = arith.constant 9.99999974E-6 : f32
    %19 = vector.broadcast %cst_11 : f32 to vector<1x32xf32>
    %20 = arith.addf %16, %19 : vector<1x32xf32>
    %21 = math.rsqrt %20 : vector<1x32xf32>
    %22 = vector.broadcast %21 : vector<1x32xf32> to vector<128x32xf32>
    %23 = arith.mulf %18, %22 : vector<128x32xf32>
    %24 = vector.broadcast %4 : vector<1x32xf32> to vector<128x32xf32>
    %25 = arith.mulf %23, %24 : vector<128x32xf32>
    %26 = vector.broadcast %5 : vector<1x32xf32> to vector<128x32xf32>
    %27 = arith.addf %25, %26 : vector<128x32xf32>
    %cst_12 = arith.constant 0.000000e+00 : f32
    %28 = vector.broadcast %cst_12 : f32 to vector<128x32xf32>
    %29 = arith.maximumf %27, %28 : vector<128x32xf32>
    %cst_13 = arith.constant 0.000000e+00 : f32
    %30 = vector.broadcast %cst_13 : f32 to vector<2x10x10x32xf32>
    %c0_14 = arith.constant 0 : index
    %c0_15 = arith.constant 0 : index
    %c0_16 = arith.constant 0 : index
    %c0_17 = arith.constant 0 : index
    %31 = vector.load %arg13[%c0_14, %c0_15, %c0_16, %c0_17] : memref<2x10x10x32xf32, #tpu.memory_space<vmem>>, vector<2x10x10x32xf32>
    tpu.vector_store %arg13[%c0_14, %c0_15, %c0_16, %c0_17], %30 {strides = array<i32>} : memref<2x10x10x32xf32, #tpu.memory_space<vmem>>, vector<2x10x10x32xf32>,
    %32 = vector.shape_cast %29 : vector<128x32xf32> to vector<2x8x8x32xf32>
    %c0_18 = arith.constant 0 : index
    %c1 = arith.constant 1 : index
    %c1_19 = arith.constant 1 : index
    %c0_20 = arith.constant 0 : index
    %33 = vector.load %arg13[%c0_18, %c1, %c1_19, %c0_20] : memref<2x10x10x32xf32, #tpu.memory_space<vmem>>, vector<2x8x8x32xf32>
    tpu.vector_store %arg13[%c0_18, %c1, %c1_19, %c0_20], %32 {strides = array<i32>} : memref<2x10x10x32xf32, #tpu.memory_space<vmem>>, vector<2x8x8x32xf32>,
    %c0_21 = arith.constant 0 : index
    %c0_22 = arith.constant 0 : index
    %c0_23 = arith.constant 0 : index
    %c0_24 = arith.constant 0 : index
    %34 = vector.load %arg13[%c0_21, %c0_22, %c0_23, %c0_24] : memref<2x10x10x32xf32, #tpu.memory_space<vmem>>, vector<2x8x8x32xf32>
    %35 = vector.shape_cast %34 : vector<2x8x8x32xf32> to vector<128x32xf32>
    %c0_25 = arith.constant 0 : index
    %c0_26 = arith.constant 0 : index
    %36 = vector.load %arg14[%c0_25, %c0_26] : memref<128x288xf32, #tpu.memory_space<vmem>>, vector<128x32xf32>
    tpu.vector_store %arg14[%c0_25, %c0_26], %35 {strides = array<i32>} : memref<128x288xf32, #tpu.memory_space<vmem>>, vector<128x32xf32>,
    %c0_27 = arith.constant 0 : index
    %c0_28 = arith.constant 0 : index
    %c1_29 = arith.constant 1 : index
    %c0_30 = arith.constant 0 : index
    %37 = vector.load %arg13[%c0_27, %c0_28, %c1_29, %c0_30] : memref<2x10x10x32xf32, #tpu.memory_space<vmem>>, vector<2x8x8x32xf32>
    %38 = vector.shape_cast %37 : vector<2x8x8x32xf32> to vector<128x32xf32>
    %c0_31 = arith.constant 0 : index
    %c32 = arith.constant 32 : index
    %39 = vector.load %arg14[%c0_31, %c32] : memref<128x288xf32, #tpu.memory_space<vmem>>, vector<128x32xf32>
    tpu.vector_store %arg14[%c0_31, %c32], %38 {strides = array<i32>} : memref<128x288xf32, #tpu.memory_space<vmem>>, vector<128x32xf32>,
    %c0_32 = arith.constant 0 : index
    %c0_33 = arith.constant 0 : index
    %c2 = arith.constant 2 : index
    %c0_34 = arith.constant 0 : index
    %40 = vector.load %arg13[%c0_32, %c0_33, %c2, %c0_34] : memref<2x10x10x32xf32, #tpu.memory_space<vmem>>, vector<2x8x8x32xf32>
    %41 = vector.shape_cast %40 : vector<2x8x8x32xf32> to vector<128x32xf32>
    %c0_35 = arith.constant 0 : index
    %c64 = arith.constant 64 : index
    %42 = vector.load %arg14[%c0_35, %c64] : memref<128x288xf32, #tpu.memory_space<vmem>>, vector<128x32xf32>
    tpu.vector_store %arg14[%c0_35, %c64], %41 {strides = array<i32>} : memref<128x288xf32, #tpu.memory_space<vmem>>, vector<128x32xf32>,
    %c0_36 = arith.constant 0 : index
    %c1_37 = arith.constant 1 : index
    %c0_38 = arith.constant 0 : index
    %c0_39 = arith.constant 0 : index
    %43 = vector.load %arg13[%c0_36, %c1_37, %c0_38, %c0_39] : memref<2x10x10x32xf32, #tpu.memory_space<vmem>>, vector<2x8x8x32xf32>
    %44 = vector.shape_cast %43 : vector<2x8x8x32xf32> to vector<128x32xf32>
    %c0_40 = arith.constant 0 : index
    %c96 = arith.constant 96 : index
    %45 = vector.load %arg14[%c0_40, %c96] : memref<128x288xf32, #tpu.memory_space<vmem>>, vector<128x32xf32>
    tpu.vector_store %arg14[%c0_40, %c96], %44 {strides = array<i32>} : memref<128x288xf32, #tpu.memory_space<vmem>>, vector<128x32xf32>,
    %c0_41 = arith.constant 0 : index
    %c1_42 = arith.constant 1 : index
    %c1_43 = arith.constant 1 : index
    %c0_44 = arith.constant 0 : index
    %46 = vector.load %arg13[%c0_41, %c1_42, %c1_43, %c0_44] : memref<2x10x10x32xf32, #tpu.memory_space<vmem>>, vector<2x8x8x32xf32>
    %47 = vector.shape_cast %46 : vector<2x8x8x32xf32> to vector<128x32xf32>
    %c0_45 = arith.constant 0 : index
    %c128 = arith.constant 128 : index
    %48 = vector.load %arg14[%c0_45, %c128] : memref<128x288xf32, #tpu.memory_space<vmem>>, vector<128x32xf32>
    tpu.vector_store %arg14[%c0_45, %c128], %47 {strides = array<i32>} : memref<128x288xf32, #tpu.memory_space<vmem>>, vector<128x32xf32>,
    %c0_46 = arith.constant 0 : index
    %c1_47 = arith.constant 1 : index
    %c2_48 = arith.constant 2 : index
    %c0_49 = arith.constant 0 : index
    %49 = vector.load %arg13[%c0_46, %c1_47, %c2_48, %c0_49] : memref<2x10x10x32xf32, #tpu.memory_space<vmem>>, vector<2x8x8x32xf32>
    %50 = vector.shape_cast %49 : vector<2x8x8x32xf32> to vector<128x32xf32>
    %c0_50 = arith.constant 0 : index
    %c160 = arith.constant 160 : index
    %51 = vector.load %arg14[%c0_50, %c160] : memref<128x288xf32, #tpu.memory_space<vmem>>, vector<128x32xf32>
    tpu.vector_store %arg14[%c0_50, %c160], %50 {strides = array<i32>} : memref<128x288xf32, #tpu.memory_space<vmem>>, vector<128x32xf32>,
    %c0_51 = arith.constant 0 : index
    %c2_52 = arith.constant 2 : index
    %c0_53 = arith.constant 0 : index
    %c0_54 = arith.constant 0 : index
    %52 = vector.load %arg13[%c0_51, %c2_52, %c0_53, %c0_54] : memref<2x10x10x32xf32, #tpu.memory_space<vmem>>, vector<2x8x8x32xf32>
    %53 = vector.shape_cast %52 : vector<2x8x8x32xf32> to vector<128x32xf32>
    %c0_55 = arith.constant 0 : index
    %c192 = arith.constant 192 : index
    %54 = vector.load %arg14[%c0_55, %c192] : memref<128x288xf32, #tpu.memory_space<vmem>>, vector<128x32xf32>
    tpu.vector_store %arg14[%c0_55, %c192], %53 {strides = array<i32>} : memref<128x288xf32, #tpu.memory_space<vmem>>, vector<128x32xf32>,
    %c0_56 = arith.constant 0 : index
    %c2_57 = arith.constant 2 : index
    %c1_58 = arith.constant 1 : index
    %c0_59 = arith.constant 0 : index
    %55 = vector.load %arg13[%c0_56, %c2_57, %c1_58, %c0_59] : memref<2x10x10x32xf32, #tpu.memory_space<vmem>>, vector<2x8x8x32xf32>
    %56 = vector.shape_cast %55 : vector<2x8x8x32xf32> to vector<128x32xf32>
    %c0_60 = arith.constant 0 : index
    %c224 = arith.constant 224 : index
    %57 = vector.load %arg14[%c0_60, %c224] : memref<128x288xf32, #tpu.memory_space<vmem>>, vector<128x32xf32>
    tpu.vector_store %arg14[%c0_60, %c224], %56 {strides = array<i32>} : memref<128x288xf32, #tpu.memory_space<vmem>>, vector<128x32xf32>,
    %c0_61 = arith.constant 0 : index
    %c2_62 = arith.constant 2 : index
    %c2_63 = arith.constant 2 : index
    %c0_64 = arith.constant 0 : index
    %58 = vector.load %arg13[%c0_61, %c2_62, %c2_63, %c0_64] : memref<2x10x10x32xf32, #tpu.memory_space<vmem>>, vector<2x8x8x32xf32>
    %59 = vector.shape_cast %58 : vector<2x8x8x32xf32> to vector<128x32xf32>
    %c0_65 = arith.constant 0 : index
    %c256 = arith.constant 256 : index
    %60 = vector.load %arg14[%c0_65, %c256] : memref<128x288xf32, #tpu.memory_space<vmem>>, vector<128x32xf32>
    tpu.vector_store %arg14[%c0_65, %c256], %59 {strides = array<i32>} : memref<128x288xf32, #tpu.memory_space<vmem>>, vector<128x32xf32>,
    %c0_66 = arith.constant 0 : index
    %c0_67 = arith.constant 0 : index
    %61 = vector.load %arg14[%c0_66, %c0_67] : memref<128x288xf32, #tpu.memory_space<vmem>>, vector<128x288xf32>
    %62 = arith.truncf %61 : vector<128x288xf32> to vector<128x288xbf16>
    %c0_68 = arith.constant 0 : index
    %c0_69 = arith.constant 0 : index
    %63 = vector.load %arg6[%c0_68, %c0_69] : memref<288x32xbf16, #tpu.memory_space<vmem>>, vector<288x32xbf16>
    %cst_70 = arith.constant dense<0.000000e+00> : vector<128x32xf32>
    %64 = tpu.matmul %62, %63, %cst_70 {dimension_numbers = #tpu.dot_dimension_numbers<[1], [0], [0], [1], [0, 0, 1, 1], [], []>} : vector<128x288xbf16>, vector<288x32xbf16>, vector<128x32xf32> -> vector<128x32xf32>
    %c0_71 = arith.constant 0 : index
    %c0_72 = arith.constant 0 : index
    %65 = vector.load %arg7[%c0_71, %c0_72] : memref<1x32xf32, #tpu.memory_space<vmem>>, vector<1x32xf32>
    %c0_73 = arith.constant 0 : index
    %c0_74 = arith.constant 0 : index
    %66 = vector.load %arg8[%c0_73, %c0_74] : memref<1x32xf32, #tpu.memory_space<vmem>>, vector<1x32xf32>
    %cst_75 = arith.constant dense<0.000000e+00> : vector<32xf32>
    %67 = vector.multi_reduction <add>, %64, %cst_75 [0] : vector<128x32xf32> to vector<32xf32>
    %68 = vector.shape_cast %67 : vector<32xf32> to vector<1x32xf32>
    %69 = arith.mulf %64, %64 : vector<128x32xf32>
    %cst_76 = arith.constant dense<0.000000e+00> : vector<32xf32>
    %70 = vector.multi_reduction <add>, %69, %cst_76 [0] : vector<128x32xf32> to vector<32xf32>
    %71 = vector.shape_cast %70 : vector<32xf32> to vector<1x32xf32>
    %cst_77 = arith.constant 7.812500e-03 : f32
    %72 = vector.broadcast %cst_77 : f32 to vector<1x32xf32>
    %73 = arith.mulf %68, %72 : vector<1x32xf32>
    %cst_78 = arith.constant 7.812500e-03 : f32
    %74 = vector.broadcast %cst_78 : f32 to vector<1x32xf32>
    %75 = arith.mulf %71, %74 : vector<1x32xf32>
    %76 = arith.mulf %73, %73 : vector<1x32xf32>
    %77 = arith.subf %75, %76 : vector<1x32xf32>
    %78 = vector.broadcast %73 : vector<1x32xf32> to vector<128x32xf32>
    %79 = arith.subf %64, %78 : vector<128x32xf32>
    %cst_79 = arith.constant 9.99999974E-6 : f32
    %80 = vector.broadcast %cst_79 : f32 to vector<1x32xf32>
    %81 = arith.addf %77, %80 : vector<1x32xf32>
    %82 = math.rsqrt %81 : vector<1x32xf32>
    %83 = vector.broadcast %82 : vector<1x32xf32> to vector<128x32xf32>
    %84 = arith.mulf %79, %83 : vector<128x32xf32>
    %85 = vector.broadcast %65 : vector<1x32xf32> to vector<128x32xf32>
    %86 = arith.mulf %84, %85 : vector<128x32xf32>
    %87 = vector.broadcast %66 : vector<1x32xf32> to vector<128x32xf32>
    %88 = arith.addf %86, %87 : vector<128x32xf32>
    %cst_80 = arith.constant 0.000000e+00 : f32
    %89 = vector.broadcast %cst_80 : f32 to vector<128x32xf32>
    %90 = arith.maximumf %88, %89 : vector<128x32xf32>
    %c0_81 = arith.constant 0 : index
    %c0_82 = arith.constant 0 : index
    %91 = vector.load %arg9[%c0_81, %c0_82] : memref<64x32xbf16, #tpu.memory_space<vmem>>, vector<64x32xbf16>
    %92 = arith.truncf %90 : vector<128x32xf32> to vector<128x32xbf16>
    %cst_83 = arith.constant dense<0.000000e+00> : vector<64x128xf32>
    %93 = tpu.matmul %91, %92, %cst_83 {dimension_numbers = #tpu.dot_dimension_numbers<[1], [1], [0], [0], [0, 0, 1, 0], [], []>} : vector<64x32xbf16>, vector<128x32xbf16>, vector<64x128xf32> -> vector<64x128xf32>
    %c0_84 = arith.constant 0 : index
    %c0_85 = arith.constant 0 : index
    %94 = vector.load %arg10[%c0_84, %c0_85] : memref<64x1xf32, #tpu.memory_space<vmem>>, vector<64x1xf32>
    %c0_86 = arith.constant 0 : index
    %c0_87 = arith.constant 0 : index
    %95 = vector.load %arg11[%c0_86, %c0_87] : memref<64x1xf32, #tpu.memory_space<vmem>>, vector<64x1xf32>
    %cst_88 = arith.constant dense<0.000000e+00> : vector<64xf32>
    %96 = vector.multi_reduction <add>, %93, %cst_88 [1] : vector<64x128xf32> to vector<64xf32>
    %97 = vector.shape_cast %96 : vector<64xf32> to vector<64x1xf32>
    %98 = arith.mulf %93, %93 : vector<64x128xf32>
    %cst_89 = arith.constant dense<0.000000e+00> : vector<64xf32>
    %99 = vector.multi_reduction <add>, %98, %cst_89 [1] : vector<64x128xf32> to vector<64xf32>
    %100 = vector.shape_cast %99 : vector<64xf32> to vector<64x1xf32>
    %cst_90 = arith.constant 7.812500e-03 : f32
    %101 = vector.broadcast %cst_90 : f32 to vector<64x1xf32>
    %102 = arith.mulf %97, %101 : vector<64x1xf32>
    %cst_91 = arith.constant 7.812500e-03 : f32
    %103 = vector.broadcast %cst_91 : f32 to vector<64x1xf32>
    %104 = arith.mulf %100, %103 : vector<64x1xf32>
    %105 = arith.mulf %102, %102 : vector<64x1xf32>
    %106 = arith.subf %104, %105 : vector<64x1xf32>
    %107 = vector.broadcast %102 : vector<64x1xf32> to vector<64x128xf32>
    %108 = arith.subf %93, %107 : vector<64x128xf32>
    %cst_92 = arith.constant 9.99999974E-6 : f32
    %109 = vector.broadcast %cst_92 : f32 to vector<64x1xf32>
    %110 = arith.addf %106, %109 : vector<64x1xf32>
    %111 = math.rsqrt %110 : vector<64x1xf32>
    %112 = vector.broadcast %111 : vector<64x1xf32> to vector<64x128xf32>
    %113 = arith.mulf %108, %112 : vector<64x128xf32>
    %114 = vector.broadcast %94 : vector<64x1xf32> to vector<64x128xf32>
    %115 = arith.mulf %113, %114 : vector<64x128xf32>
    %116 = vector.broadcast %95 : vector<64x1xf32> to vector<64x128xf32>
    %117 = arith.addf %115, %116 : vector<64x128xf32>
    %c0_93 = arith.constant 0 : index
    %c0_94 = arith.constant 0 : index
    %118 = vector.load %arg2[%c0_93, %c0_94] : memref<64x128xf32, #tpu.memory_space<vmem>>, vector<64x128xf32>
    %119 = arith.addf %117, %118 : vector<64x128xf32>
    %cst_95 = arith.constant 0.000000e+00 : f32
    %120 = vector.broadcast %cst_95 : f32 to vector<64x128xf32>
    %121 = arith.maximumf %119, %120 : vector<64x128xf32>
    %c0_96 = arith.constant 0 : index
    %c0_97 = arith.constant 0 : index
    %122 = vector.load %arg12[%c0_96, %c0_97] : memref<64x128xf32, #tpu.memory_space<vmem>>, vector<64x128xf32>
    tpu.vector_store %arg12[%c0_96, %c0_97], %121 {strides = array<i32>} : memref<64x128xf32, #tpu.memory_space<vmem>>, vector<64x128xf32>,
    return
  }
  func.func @transform_0(%arg0: i32) -> (i32, i32) {
    %c0_i32 = arith.constant 0 : i32
    %c0_i32_0 = arith.constant 0 : i32
    %c0_i32_1 = arith.constant 0 : i32
    return %c0_i32, %c0_i32_0 : i32, i32
  }
  func.func @transform_1(%arg0: i32) -> (i32, i32) {
    %c0_i32 = arith.constant 0 : i32
    %c0_i32_0 = arith.constant 0 : i32
    %c0_i32_1 = arith.constant 0 : i32
    return %c0_i32, %c0_i32_0 : i32, i32
  }
  func.func @transform_2(%arg0: i32) -> (i32, i32) {
    %c0_i32 = arith.constant 0 : i32
    %c0_i32_0 = arith.constant 0 : i32
    %c0_i32_1 = arith.constant 0 : i32
    return %c0_i32, %c0_i32_0 : i32, i32
  }
  func.func @transform_3(%arg0: i32) -> (i32, i32) {
    %c0_i32 = arith.constant 0 : i32
    %c0_i32_0 = arith.constant 0 : i32
    %c0_i32_1 = arith.constant 0 : i32
    return %c0_i32, %c0_i32_0 : i32, i32
  }
  func.func @transform_4(%arg0: i32) -> (i32, i32) {
    %c0_i32 = arith.constant 0 : i32
    %c0_i32_0 = arith.constant 0 : i32
    %c0_i32_1 = arith.constant 0 : i32
    return %c0_i32, %c0_i32_0 : i32, i32
  }
  func.func @transform_5(%arg0: i32) -> (i32, i32) {
    %c0_i32 = arith.constant 0 : i32
    %c0_i32_0 = arith.constant 0 : i32
    %c0_i32_1 = arith.constant 0 : i32
    return %c0_i32, %c0_i32_0 : i32, i32
  }
  func.func @transform_6(%arg0: i32) -> (i32, i32) {
    %c0_i32 = arith.constant 0 : i32
    %c0_i32_0 = arith.constant 0 : i32
    %c0_i32_1 = arith.constant 0 : i32
    return %c0_i32, %c0_i32_0 : i32, i32
  }
  func.func @transform_7(%arg0: i32) -> (i32, i32) {
    %c0_i32 = arith.constant 0 : i32
    %c0_i32_0 = arith.constant 0 : i32
    %c0_i32_1 = arith.constant 0 : i32
    return %c0_i32, %c0_i32_0 : i32, i32
  }
  func.func @transform_8(%arg0: i32) -> (i32, i32) {
    %c0_i32 = arith.constant 0 : i32
    %c0_i32_0 = arith.constant 0 : i32
    %c0_i32_1 = arith.constant 0 : i32
    return %c0_i32, %c0_i32_0 : i32, i32
  }
  func.func @transform_9(%arg0: i32) -> (i32, i32) {
    %c0_i32 = arith.constant 0 : i32
    %c0_i32_0 = arith.constant 0 : i32
    %c0_i32_1 = arith.constant 0 : i32
    return %c0_i32, %c0_i32_0 : i32, i32
  }
  func.func @transform_10(%arg0: i32) -> (i32, i32) {
    %c0_i32 = arith.constant 0 : i32
    %c0_i32_0 = arith.constant 0 : i32
    %c0_i32_1 = arith.constant 0 : i32
    return %c0_i32, %c0_i32_0 : i32, i32
  }
  func.func @transform_11(%arg0: i32) -> (i32, i32) {
    %c0_i32 = arith.constant 0 : i32
    %c0_i32_0 = arith.constant 0 : i32
    %c0_i32_1 = arith.constant 0 : i32
    return %c0_i32, %c0_i32_0 : i32, i32
  }
}

</mosaic_0001>

<llo_original>
// kernel: tpu_custom_call.1
$region0: #{tpu_custom_call.1}
  #allocation0 [shape = 'u32[]', space=smem, size = 0x4, offset = 0x4, fixed_abs, tag = 'smem constant byte address 0x4 - core index']
  #allocation1 [shape = 'u32[144,128]{1,0:T(1,128)}', space=vmem, size = 0x12000, scoped, tag = 'internal scratch']
  #allocation2 [shape = 'f32[2,10,10,32]{3,2,1,0:T(8,128)}', space=vmem, size = 0x28000, scoped, tag = 'scratch operand']
  #allocation3 [shape = 'f32[128,288]{1,0:T(8,128)}', space=vmem, size = 0x30000, scoped, tag = 'scratch operand']
  %s0 = inlined_call_operand.vmem [shape: f32[128,64], index: 0, kind: input, shape index: {}]
  %s1 = inlined_call_operand.vmem [shape: f32[64,128], index: 1, kind: input, shape index: {}]
  %s2 = inlined_call_operand.vmem [shape: bf16[64,32], index: 2, kind: input, shape index: {}]
  %s3 = inlined_call_operand.vmem [shape: f32[1,32], index: 3, kind: input, shape index: {}]
  %s4 = inlined_call_operand.vmem [shape: f32[1,32], index: 4, kind: input, shape index: {}]
  %s5 = inlined_call_operand.vmem [shape: bf16[288,32], index: 5, kind: input, shape index: {}]
  %s6 = inlined_call_operand.vmem [shape: f32[1,32], index: 6, kind: input, shape index: {}]
  %s7 = inlined_call_operand.vmem [shape: f32[1,32], index: 7, kind: input, shape index: {}]
  %s8 = inlined_call_operand.vmem [shape: bf16[64,32], index: 8, kind: input, shape index: {}]
  %s9 = inlined_call_operand.vmem [shape: f32[64,1], index: 9, kind: input, shape index: {}]
  %s10 = inlined_call_operand.vmem [shape: f32[64,1], index: 10, kind: input, shape index: {}]
  %s11 = inlined_call_operand.hbm [shape: f32[64,128], index: 11, kind: output, shape index: {}]
  %s12 = sld [smem:[#allocation0]]
  $region54: #{tpu_custom_call.1} parent=0
    _
  %s14 = ssub.s32 1, %s12
  %s15 = scalar_select 0, %s14, %s12
  $region1: #{tpu_custom_call.1} parent=0
    #allocation4 [shape = 'u8[32768]{0}', space=vmem, size = 0x8000, scoped, tag = 'output window, operand 0, single buffered']
    #allocation5 [shape = 's32[1]{0}', space=sflag, size = 0x4, scoped, tag = 'scoped memory for tpu_custom_call.1']
    %16 = vsyncpa [#allocation5], 0
    // Predicated region
    $region2: #{tpu_custom_call.1} parent=1 // pred_check
      _
    $region3: #{tpu_custom_call.1} parent=1 // pred_check_branch
      %18 = sbr.rel (0) target = $region5
    $region4: #{tpu_custom_call.1} parent=1 // pred_region
      _
    $region5: #{tpu_custom_call.1} parent=1 // pred_fallthru
      _
    // Predicated region
    $region6: #{tpu_custom_call.1} parent=1 // pred_check
      _
    $region7: #{tpu_custom_call.1} parent=1 // pred_check_branch
      %20 = sbr.rel (0) target = $region9
    $region8: #{tpu_custom_call.1} parent=1 // pred_region
      _
    $region9: #{tpu_custom_call.1} parent=1 // pred_fallthru
      _
    // Predicated region
    $region10: #{tpu_custom_call.1} parent=1 // pred_check
      _
    $region11: #{tpu_custom_call.1} parent=1 // pred_check_branch
      %22 = sbr.rel (0) target = $region13
    $region12: #{tpu_custom_call.1} parent=1 // pred_region
      _
    $region13: #{tpu_custom_call.1} parent=1 // pred_fallthru
      _
    // Predicated region
    $region14: #{tpu_custom_call.1} parent=1 // pred_check
      _
    $region15: #{tpu_custom_call.1} parent=1 // pred_check_branch
      %24 = sbr.rel (0) target = $region17
    $region16: #{tpu_custom_call.1} parent=1 // pred_region
      _
    $region17: #{tpu_custom_call.1} parent=1 // pred_fallthru
      _
    // Predicated region
    $region18: #{tpu_custom_call.1} parent=1 // pred_check
      _
    $region19: #{tpu_custom_call.1} parent=1 // pred_check_branch
      %26 = sbr.rel (0) target = $region21
    $region20: #{tpu_custom_call.1} parent=1 // pred_region
      _
    $region21: #{tpu_custom_call.1} parent=1 // pred_fallthru
      _
    // Predicated region
    $region22: #{tpu_custom_call.1} parent=1 // pred_check
      _
    $region23: #{tpu_custom_call.1} parent=1 // pred_check_branch
      %28 = sbr.rel (0) target = $region25
    $region24: #{tpu_custom_call.1} parent=1 // pred_region
      _
    $region25: #{tpu_custom_call.1} parent=1 // pred_fallthru
      _
    // Predicated region
    $region26: #{tpu_custom_call.1} parent=1 // pred_check
      _
    $region27: #{tpu_custom_call.1} parent=1 // pred_check_branch
      %30 = sbr.rel (0) target = $region29
    $region28: #{tpu_custom_call.1} parent=1 // pred_region
      _
    $region29: #{tpu_custom_call.1} parent=1 // pred_fallthru
      _
    // Predicated region
    $region30: #{tpu_custom_call.1} parent=1 // pred_check
      _
    $region31: #{tpu_custom_call.1} parent=1 // pred_check_branch
      %32 = sbr.rel (0) target = $region33
    $region32: #{tpu_custom_call.1} parent=1 // pred_region
      _
    $region33: #{tpu_custom_call.1} parent=1 // pred_fallthru
      _
    // Predicated region
    $region34: #{tpu_custom_call.1} parent=1 // pred_check
      _
    $region35: #{tpu_custom_call.1} parent=1 // pred_check_branch
      %34 = sbr.rel (0) target = $region37
    $region36: #{tpu_custom_call.1} parent=1 // pred_region
      _
    $region37: #{tpu_custom_call.1} parent=1 // pred_fallthru
      _
    // Predicated region
    $region38: #{tpu_custom_call.1} parent=1 // pred_check
      _
    $region39: #{tpu_custom_call.1} parent=1 // pred_check_branch
      %36 = sbr.rel (0) target = $region41
    $region40: #{tpu_custom_call.1} parent=1 // pred_region
      _
    $region41: #{tpu_custom_call.1} parent=1 // pred_fallthru
      _
    // Predicated region
    $region42: #{tpu_custom_call.1} parent=1 // pred_check
      _
    $region43: #{tpu_custom_call.1} parent=1 // pred_check_branch
      %38 = sbr.rel (0) target = $region45
    $region44: #{tpu_custom_call.1} parent=1 // pred_region
      _
    $region45: #{tpu_custom_call.1} parent=1 // pred_fallthru
      _
    %v40 = vld [vmem:[%s0] sm:$0xff]
    %v41 = vld [vmem:[%s0 + $0x8] sm:$0xff]
    %v42 = vld [vmem:[%s0 + $0x10] sm:$0xff]
    %v43 = vld [vmem:[%s0 + $0x18] sm:$0xff]
    %v44 = vld [vmem:[%s0 + $0x20] sm:$0xff]
    %v45 = vld [vmem:[%s0 + $0x28] sm:$0xff]
    %v46 = vld [vmem:[%s0 + $0x30] sm:$0xff]
    %v47 = vld [vmem:[%s0 + $0x38] sm:$0xff]
    %v48 = vld [vmem:[%s0 + $0x40] sm:$0xff]
    %v49 = vld [vmem:[%s0 + $0x48] sm:$0xff]
    %v50 = vld [vmem:[%s0 + $0x50] sm:$0xff]
    %v51 = vld [vmem:[%s0 + $0x58] sm:$0xff]
    %v52 = vld [vmem:[%s0 + $0x60] sm:$0xff]
    %v53 = vld [vmem:[%s0 + $0x68] sm:$0xff]
    %v54 = vld [vmem:[%s0 + $0x70] sm:$0xff]
    %v55 = vld [vmem:[%s0 + $0x78] sm:$0xff]
    %v56 = vpack.c.bf16 %v41, %v40
    %v57 = vpack.c.bf16 %v43, %v42
    %v58 = vpack.c.bf16 %v45, %v44
    %v59 = vpack.c.bf16 %v47, %v46
    %v60 = vpack.c.bf16 %v49, %v48
    %v61 = vpack.c.bf16 %v51, %v50
    %v62 = vpack.c.bf16 %v53, %v52
    %v63 = vpack.c.bf16 %v55, %v54
    %v64 = vld [vmem:[%s2] sm:$0xf]
    %v65 = vld [vmem:[%s2 + $0x4] sm:$0xf]
    %v66 = vld [vmem:[%s2 + $0x8] sm:$0xf]
    %v67 = vld [vmem:[%s2 + $0xc] sm:$0xf]
    %v68 = vld [vmem:[%s2 + $0x10] sm:$0xf]
    %v69 = vld [vmem:[%s2 + $0x14] sm:$0xf]
    %v70 = vld [vmem:[%s2 + $0x18] sm:$0xf]
    %v71 = vld [vmem:[%s2 + $0x1c] sm:$0xf]
    %v80 = vunpack.c.l.b16 %v64
    %v81 = vunpack.c.l.b16 %v65
    %v82 = vunpack.c.l.b16 %v66
    %v83 = vunpack.c.l.b16 %v67
    %v84 = vunpack.c.l.b16 %v68
    %v85 = vunpack.c.l.b16 %v69
    %v86 = vunpack.c.l.b16 %v70
    %v87 = vunpack.c.l.b16 %v71
    %v88 = vpack.c.b16 %v81, %v80
    %v89 = vpack.c.b16 %v83, %v82
    %v90 = vpack.c.b16 %v85, %v84
    %v91 = vpack.c.b16 %v87, %v86
    %vm96 = vcmask 523264
    %v98 = vsel %vm96, %v56, 0
    %v101 = vsel %vm96, %v57, 0
    %v104 = vsel %vm96, %v58, 0
    %v107 = vsel %vm96, %v59, 0
    %v110 = vsel %vm96, %v60, 0
    %v113 = vsel %vm96, %v61, 0
    %v116 = vsel %vm96, %v62, 0
    %v119 = vsel %vm96, %v63, 0
    %121 = vmatprep.subr.bf16.mxu0 0
    %122 = vmatpush1.bf16.msra.mxu0 %v88
    %123 = vmatprep.subr.bf16.mxu0 0
    %124 = vmatpush1.bf16.msra.mxu0 %v89
    %125 = vmatprep.subr.bf16.mxu0 0
    %126 = vmatpush1.bf16.msra.mxu0 %v90
    %127 = vmatprep.subr.bf16.mxu0 0
    %128 = vmatpush1.bf16.msra.mxu0 %v91
    %129 = vmatprep.subr.bf16.mxu0 0
    %130 = vmatpush1.bf16.msra.mxu0 0
    %131 = vmatprep.subr.bf16.mxu0 0
    %132 = vmatpush1.bf16.msra.mxu0 0
    %133 = vmatprep.subr.bf16.mxu0 0
    %134 = vmatpush1.bf16.msra.mxu0 0
    %135 = vmatprep.subr.bf16.mxu0 0
    %136 = vmatpush1.bf16.msra.mxu0 0
    %137 = vmatprep.subr.bf16.mxu0 0
    %138 = vmatpush1.bf16.msra.mxu0 0
    %139 = vmatprep.subr.bf16.mxu0 0
    %140 = vmatpush1.bf16.msra.mxu0 0
    %141 = vmatprep.subr.bf16.mxu0 0
    %142 = vmatpush1.bf16.msra.mxu0 0
    %143 = vmatprep.subr.bf16.mxu0 0
    %144 = vmatpush1.bf16.msra.mxu0 0
    %145 = vmatprep.subr.bf16.mxu0 0
    %146 = vmatpush1.bf16.msra.mxu0 0
    %147 = vmatprep.subr.bf16.mxu0 0
    %148 = vmatpush1.bf16.msra.mxu0 0
    %149 = vmatprep.subr.bf16.mxu0 0
    %150 = vmatpush1.bf16.msra.mxu0 0
    %151 = vmatprep.subr.bf16.mxu0 0
    %152 = vmatpush1.bf16.msra.mxu0 0
    %153 = vmatprep.mubr.bf16.mxu0 0
    %154 = vmatmul.mubr.bf16.gmra.mrb[0].mxu0 %v98
    %v155 = vpop.f32.mrb[0].mxu0
    %v156 = vadd.f32 0.0, %v155
    %v157 = vpop.f32.mrb[0].mxu0
    %v158 = vpop.f32.mrb[0].mxu0
    %v159 = vadd.f32 0.0, %v158
    %v160 = vpop.f32.mrb[0].mxu0
    %161 = vmatprep.mubr.bf16.mxu0 0
    %162 = vmatmul.mubr.bf16.gmra.mrb[0].mxu0 %v101
    %v163 = vpop.f32.mrb[0].mxu0
    %v164 = vadd.f32 0.0, %v163
    %v165 = vpop.f32.mrb[0].mxu0
    %v166 = vpop.f32.mrb[0].mxu0
    %v167 = vadd.f32 0.0, %v166
    %v168 = vpop.f32.mrb[0].mxu0
    %169 = vmatprep.mubr.bf16.mxu0 0
    %170 = vmatmul.mubr.bf16.gmra.mrb[0].mxu0 %v104
    %v171 = vpop.f32.mrb[0].mxu0
    %v172 = vadd.f32 0.0, %v171
    %v173 = vpop.f32.mrb[0].mxu0
    %v174 = vpop.f32.mrb[0].mxu0
    %v175 = vadd.f32 0.0, %v174
    %v176 = vpop.f32.mrb[0].mxu0
    %177 = vmatprep.mubr.bf16.mxu0 0
    %178 = vmatmul.mubr.bf16.gmra.mrb[0].mxu0 %v107
    %v179 = vpop.f32.mrb[0].mxu0
    %v180 = vadd.f32 0.0, %v179
    %v181 = vpop.f32.mrb[0].mxu0
    %v182 = vpop.f32.mrb[0].mxu0
    %v183 = vadd.f32 0.0, %v182
    %v184 = vpop.f32.mrb[0].mxu0
    %185 = vmatprep.mubr.bf16.mxu0 0
    %186 = vmatmul.mubr.bf16.gmra.mrb[0].mxu0 %v110
    %v187 = vpop.f32.mrb[0].mxu0
    %v188 = vadd.f32 0.0, %v187
    %v189 = vpop.f32.mrb[0].mxu0
    %v190 = vpop.f32.mrb[0].mxu0
    %v191 = vadd.f32 0.0, %v190
    %v192 = vpop.f32.mrb[0].mxu0
    %193 = vmatprep.mubr.bf16.mxu0 0
    %194 = vmatmul.mubr.bf16.gmra.mrb[0].mxu0 %v113
    %v195 = vpop.f32.mrb[0].mxu0
    %v196 = vadd.f32 0.0, %v195
    %v197 = vpop.f32.mrb[0].mxu0
    %v198 = vpop.f32.mrb[0].mxu0
    %v199 = vadd.f32 0.0, %v198
    %v200 = vpop.f32.mrb[0].mxu0
    %201 = vmatprep.mubr.bf16.mxu0 0
    %202 = vmatmul.mubr.bf16.gmra.mrb[0].mxu0 %v116
    %v203 = vpop.f32.mrb[0].mxu0
    %v204 = vadd.f32 0.0, %v203
    %v205 = vpop.f32.mrb[0].mxu0
    %v206 = vpop.f32.mrb[0].mxu0
    %v207 = vadd.f32 0.0, %v206
    %v208 = vpop.f32.mrb[0].mxu0
    %209 = vmatprep.mubr.bf16.mxu0 0
    %210 = vmatmul.mubr.bf16.gmra.mrb[0].mxu0 %v119
    %v211 = vpop.f32.mrb[0].mxu0
    %v212 = vadd.f32 0.0, %v211
    %v213 = vpop.f32.mrb[0].mxu0
    %v214 = vpop.f32.mrb[0].mxu0
    %v215 = vadd.f32 0.0, %v214
    %v216 = vpop.f32.mrb[0].mxu0
    %217 = vdwg.mxu0
    %v218 = vld [vmem:[%s3] sm:$0x1]
    %v219 = vld [vmem:[%s4] sm:$0x1]
    %vm220 = vcmask 261120
    %v221 = vsel %vm220, %v156, 0.0
    %v222 = vsel %vm220, %v159, 0.0
    %v223 = vadd.f32 %v221, %v222
    %v224 = vsel %vm220, %v164, 0.0
    %v225 = vadd.f32 %v223, %v224
    %v226 = vsel %vm220, %v167, 0.0
    %v227 = vadd.f32 %v225, %v226
    %v228 = vsel %vm220, %v172, 0.0
    %v229 = vadd.f32 %v227, %v228
    %v230 = vsel %vm220, %v175, 0.0
    %v231 = vadd.f32 %v229, %v230
    %v232 = vsel %vm220, %v180, 0.0
    %v233 = vadd.f32 %v231, %v232
    %v234 = vsel %vm220, %v183, 0.0
    %v235 = vadd.f32 %v233, %v234
    %v236 = vsel %vm220, %v188, 0.0
    %v237 = vadd.f32 %v235, %v236
    %v238 = vsel %vm220, %v191, 0.0
    %v239 = vadd.f32 %v237, %v238
    %v240 = vsel %vm220, %v196, 0.0
    %v241 = vadd.f32 %v239, %v240
    %v242 = vsel %vm220, %v199, 0.0
    %v243 = vadd.f32 %v241, %v242
    %v244 = vsel %vm220, %v204, 0.0
    %v245 = vadd.f32 %v243, %v244
    %v246 = vsel %vm220, %v207, 0.0
    %v247 = vadd.f32 %v245, %v246
    %v248 = vsel %vm220, %v212, 0.0
    %v249 = vadd.f32 %v247, %v248
    %v250 = vsel %vm220, %v215, 0.0
    %v251 = vadd.f32 %v249, %v250
    %v252 = vrot.slane %v251, 4
    %v253 = vadd.f32 %v251, %v252
    %v254 = vrot.slane %v253, 2
    %v255 = vadd.f32 %v253, %v254
    %v256 = vrot.slane %v255, 1
    %v257 = vadd.f32 %v255, %v256
    %v258 = vmul.f32 %v156, %v156
    %v259 = vmul.f32 %v159, %v159
    %v260 = vmul.f32 %v164, %v164
    %v261 = vmul.f32 %v167, %v167
    %v262 = vmul.f32 %v172, %v172
    %v263 = vmul.f32 %v175, %v175
    %v264 = vmul.f32 %v180, %v180
    %v265 = vmul.f32 %v183, %v183
    %v266 = vmul.f32 %v188, %v188
    %v267 = vmul.f32 %v191, %v191
    %v268 = vmul.f32 %v196, %v196
    %v269 = vmul.f32 %v199, %v199
    %v270 = vmul.f32 %v204, %v204
    %v271 = vmul.f32 %v207, %v207
    %v272 = vmul.f32 %v212, %v212
    %v273 = vmul.f32 %v215, %v215
    %v274 = vsel %vm220, %v258, 0.0
    %v275 = vsel %vm220, %v259, 0.0
    %v276 = vadd.f32 %v274, %v275
    %v277 = vsel %vm220, %v260, 0.0
    %v278 = vadd.f32 %v276, %v277
    %v279 = vsel %vm220, %v261, 0.0
    %v280 = vadd.f32 %v278, %v279
    %v281 = vsel %vm220, %v262, 0.0
    %v282 = vadd.f32 %v280, %v281
    %v283 = vsel %vm220, %v263, 0.0
    %v284 = vadd.f32 %v282, %v283
    %v285 = vsel %vm220, %v264, 0.0
    %v286 = vadd.f32 %v284, %v285
    %v287 = vsel %vm220, %v265, 0.0
    %v288 = vadd.f32 %v286, %v287
    %v289 = vsel %vm220, %v266, 0.0
    %v290 = vadd.f32 %v288, %v289
    %v291 = vsel %vm220, %v267, 0.0
    %v292 = vadd.f32 %v290, %v291
    %v293 = vsel %vm220, %v268, 0.0
    %v294 = vadd.f32 %v292, %v293
    %v295 = vsel %vm220, %v269, 0.0
    %v296 = vadd.f32 %v294, %v295
    %v297 = vsel %vm220, %v270, 0.0
    %v298 = vadd.f32 %v296, %v297
    %v299 = vsel %vm220, %v271, 0.0
    %v300 = vadd.f32 %v298, %v299
    %v301 = vsel %vm220, %v272, 0.0
    %v302 = vadd.f32 %v300, %v301
    %v303 = vsel %vm220, %v273, 0.0
    %v304 = vadd.f32 %v302, %v303
    %v305 = vrot.slane %v304, 4
    %v306 = vadd.f32 %v304, %v305
    %v307 = vrot.slane %v306, 2
    %v308 = vadd.f32 %v306, %v307
    %v309 = vrot.slane %v308, 1
    %v310 = vadd.f32 %v308, %v309
    %v311 = vmul.f32 %v257, 0.0078125
    %v312 = vmul.f32 %v310, 0.0078125
    %v313 = vmul.f32 %v311, %v311
    %v314 = vsub.f32 %v312, %v313
    %v315 = vsub.f32 %v156, %v311
    %v316 = vsub.f32 %v159, %v311
    %v317 = vsub.f32 %v164, %v311
    %v318 = vsub.f32 %v167, %v311
    %v319 = vsub.f32 %v172, %v311
    %v320 = vsub.f32 %v175, %v311
    %v321 = vsub.f32 %v180, %v311
    %v322 = vsub.f32 %v183, %v311
    %v323 = vsub.f32 %v188, %v311
    %v324 = vsub.f32 %v191, %v311
    %v325 = vsub.f32 %v196, %v311
    %v326 = vsub.f32 %v199, %v311
    %v327 = vsub.f32 %v204, %v311
    %v328 = vsub.f32 %v207, %v311
    %v329 = vsub.f32 %v212, %v311
    %v330 = vsub.f32 %v215, %v311
    %v331 = vadd.f32 %v314, 1e-05
    %v332 = vrsqrt.pop %v331
    %v333 = vmul.f32 %v315, %v332
    %v334 = vmul.f32 %v316, %v332
    %v335 = vmul.f32 %v317, %v332
    %v336 = vmul.f32 %v318, %v332
    %v337 = vmul.f32 %v319, %v332
    %v338 = vmul.f32 %v320, %v332
    %v339 = vmul.f32 %v321, %v332
    %v340 = vmul.f32 %v322, %v332
    %v341 = vmul.f32 %v323, %v332
    %v342 = vmul.f32 %v324, %v332
    %v343 = vmul.f32 %v325, %v332
    %v344 = vmul.f32 %v326, %v332
    %v345 = vmul.f32 %v327, %v332
    %v346 = vmul.f32 %v328, %v332
    %v347 = vmul.f32 %v329, %v332
    %v348 = vmul.f32 %v330, %v332
    %v350 = vlaneseq
    %v351 = vshrl.u32 %v350, 7
    %v352 = vsub.s32 0, %v351
    %v353 = vrot.slane %v218, %v352
    %v355 = vmul.f32 %v333, %v353
    %v356 = vmul.f32 %v334, %v353
    %v357 = vmul.f32 %v335, %v353
    %v358 = vmul.f32 %v336, %v353
    %v359 = vmul.f32 %v337, %v353
    %v360 = vmul.f32 %v338, %v353
    %v361 = vmul.f32 %v339, %v353
    %v362 = vmul.f32 %v340, %v353
    %v363 = vmul.f32 %v341, %v353
    %v364 = vmul.f32 %v342, %v353
    %v365 = vmul.f32 %v343, %v353
    %v366 = vmul.f32 %v344, %v353
    %v367 = vmul.f32 %v345, %v353
    %v368 = vmul.f32 %v346, %v353
    %v369 = vmul.f32 %v347, %v353
    %v370 = vmul.f32 %v348, %v353
    %v372 = vlaneseq
    %v373 = vshrl.u32 %v372, 7
    %v374 = vsub.s32 0, %v373
    %v375 = vrot.slane %v219, %v374
    %v377 = vadd.f32 %v355, %v375
    %v378 = vadd.f32 %v356, %v375
    %v379 = vadd.f32 %v357, %v375
    %v380 = vadd.f32 %v358, %v375
    %v381 = vadd.f32 %v359, %v375
    %v382 = vadd.f32 %v360, %v375
    %v383 = vadd.f32 %v361, %v375
    %v384 = vadd.f32 %v362, %v375
    %v385 = vadd.f32 %v363, %v375
    %v386 = vadd.f32 %v364, %v375
    %v387 = vadd.f32 %v365, %v375
    %v388 = vadd.f32 %v366, %v375
    %v389 = vadd.f32 %v367, %v375
    %v390 = vadd.f32 %v368, %v375
    %v391 = vadd.f32 %v369, %v375
    %v392 = vadd.f32 %v370, %v375
    %v393 = vmax.f32 %v377, 0.0
    %v394 = vmax.f32 %v378, 0.0
    %v395 = vmax.f32 %v379, 0.0
    %v396 = vmax.f32 %v380, 0.0
    %v397 = vmax.f32 %v381, 0.0
    %v398 = vmax.f32 %v382, 0.0
    %v399 = vmax.f32 %v383, 0.0
    %v400 = vmax.f32 %v384, 0.0
    %v401 = vmax.f32 %v385, 0.0
    %v402 = vmax.f32 %v386, 0.0
    %v403 = vmax.f32 %v387, 0.0
    %v404 = vmax.f32 %v388, 0.0
    %v405 = vmax.f32 %v389, 0.0
    %v406 = vmax.f32 %v390, 0.0
    %v407 = vmax.f32 %v391, 0.0
    %v408 = vmax.f32 %v392, 0.0
    %409 = vst.msk [vmem:[#allocation2] sm:$0xff] %vm220, 0.0
    %vm410 = vcmask 254976
    %411 = vst.msk [vmem:[#allocation2 + $0x8] sm:$0x3] %vm410, 0.0
    %412 = vst.msk [vmem:[#allocation2 + $0x10] sm:$0xff] %vm220, 0.0
    %413 = vst.msk [vmem:[#allocation2 + $0x18] sm:$0x3] %vm410, 0.0
    %414 = vst.msk [vmem:[#allocation2 + $0x20] sm:$0xff] %vm220, 0.0
    %415 = vst.msk [vmem:[#allocation2 + $0x28] sm:$0x3] %vm410, 0.0
    %416 = vst.msk [vmem:[#allocation2 + $0x30] sm:$0xff] %vm220, 0.0
    %417 = vst.msk [vmem:[#allocation2 + $0x38] sm:$0x3] %vm410, 0.0
    %418 = vst.msk [vmem:[#allocation2 + $0x40] sm:$0xff] %vm220, 0.0
    %419 = vst.msk [vmem:[#allocation2 + $0x48] sm:$0x3] %vm410, 0.0
    %420 = vst.msk [vmem:[#allocation2 + $0x50] sm:$0xff] %vm220, 0.0
    %421 = vst.msk [vmem:[#allocation2 + $0x58] sm:$0x3] %vm410, 0.0
    %422 = vst.msk [vmem:[#allocation2 + $0x60] sm:$0xff] %vm220, 0.0
    %423 = vst.msk [vmem:[#allocation2 + $0x68] sm:$0x3] %vm410, 0.0
    %424 = vst.msk [vmem:[#allocation2 + $0x70] sm:$0xff] %vm220, 0.0
    %425 = vst.msk [vmem:[#allocation2 + $0x78] sm:$0x3] %vm410, 0.0
    %426 = vst.msk [vmem:[#allocation2 + $0x80] sm:$0xff] %vm220, 0.0
    %427 = vst.msk [vmem:[#allocation2 + $0x88] sm:$0x3] %vm410, 0.0
    %428 = vst.msk [vmem:[#allocation2 + $0x90] sm:$0xff] %vm220, 0.0
    %429 = vst.msk [vmem:[#allocation2 + $0x98] sm:$0x3] %vm410, 0.0
    %430 = vst.msk [vmem:[#allocation2 + $0xa0] sm:$0xff] %vm220, 0.0
    %431 = vst.msk [vmem:[#allocation2 + $0xa8] sm:$0x3] %vm410, 0.0
    %432 = vst.msk [vmem:[#allocation2 + $0xb0] sm:$0xff] %vm220, 0.0
    %433 = vst.msk [vmem:[#allocation2 + $0xb8] sm:$0x3] %vm410, 0.0
    %434 = vst.msk [vmem:[#allocation2 + $0xc0] sm:$0xff] %vm220, 0.0
    %435 = vst.msk [vmem:[#allocation2 + $0xc8] sm:$0x3] %vm410, 0.0
    %436 = vst.msk [vmem:[#allocation2 + $0xd0] sm:$0xff] %vm220, 0.0
    %437 = vst.msk [vmem:[#allocation2 + $0xd8] sm:$0x3] %vm410, 0.0
    %438 = vst.msk [vmem:[#allocation2 + $0xe0] sm:$0xff] %vm220, 0.0
    %439 = vst.msk [vmem:[#allocation2 + $0xe8] sm:$0x3] %vm410, 0.0
    %440 = vst.msk [vmem:[#allocation2 + $0xf0] sm:$0xff] %vm220, 0.0
    %441 = vst.msk [vmem:[#allocation2 + $0xf8] sm:$0x3] %vm410, 0.0
    %442 = vst.msk [vmem:[#allocation2 + $0x100] sm:$0xff] %vm220, 0.0
    %443 = vst.msk [vmem:[#allocation2 + $0x108] sm:$0x3] %vm410, 0.0
    %444 = vst.msk [vmem:[#allocation2 + $0x110] sm:$0xff] %vm220, 0.0
    %445 = vst.msk [vmem:[#allocation2 + $0x118] sm:$0x3] %vm410, 0.0
    %446 = vst.msk [vmem:[#allocation2 + $0x120] sm:$0xff] %vm220, 0.0
    %447 = vst.msk [vmem:[#allocation2 + $0x128] sm:$0x3] %vm410, 0.0
    %448 = vst.msk [vmem:[#allocation2 + $0x130] sm:$0xff] %vm220, 0.0
    %449 = vst.msk [vmem:[#allocation2 + $0x138] sm:$0x3] %vm410, 0.0
    %s450 = scalar_lea.vmem [#allocation2], 16
    %451 = vst.msk [vmem:[%s450 + $0x1] sm:$0xff] %vm220, %v393
    %452 = vst.msk [vmem:[%s450 + $0x11] sm:$0xff] %vm220, %v394
    %453 = vst.msk [vmem:[%s450 + $0x21] sm:$0xff] %vm220, %v395
    %454 = vst.msk [vmem:[%s450 + $0x31] sm:$0xff] %vm220, %v396
    %455 = vst.msk [vmem:[%s450 + $0x41] sm:$0xff] %vm220, %v397
    %456 = vst.msk [vmem:[%s450 + $0x51] sm:$0xff] %vm220, %v398
    %457 = vst.msk [vmem:[%s450 + $0x61] sm:$0xff] %vm220, %v399
    %458 = vst.msk [vmem:[%s450 + $0x71] sm:$0xff] %vm220, %v400
    %459 = vst.msk [vmem:[%s450 + $0xa1] sm:$0xff] %vm220, %v401
    %460 = vst.msk [vmem:[%s450 + $0xb1] sm:$0xff] %vm220, %v402
    %461 = vst.msk [vmem:[%s450 + $0xc1] sm:$0xff] %vm220, %v403
    %462 = vst.msk [vmem:[%s450 + $0xd1] sm:$0xff] %vm220, %v404
    %463 = vst.msk [vmem:[%s450 + $0xe1] sm:$0xff] %vm220, %v405
    %464 = vst.msk [vmem:[%s450 + $0xf1] sm:$0xff] %vm220, %v406
    %465 = vst.msk [vmem:[%s450 + $0x101] sm:$0xff] %vm220, %v407
    %466 = vst.msk [vmem:[%s450 + $0x111] sm:$0xff] %vm220, %v408
    %v467 = vld [vmem:[#allocation2] sm:$0xff]
    %v468 = vld [vmem:[#allocation2 + $0x10] sm:$0xff]
    %v469 = vld [vmem:[#allocation2 + $0x20] sm:$0xff]
    %v470 = vld [vmem:[#allocation2 + $0x30] sm:$0xff]
    %v471 = vld [vmem:[#allocation2 + $0x40] sm:$0xff]
    %v472 = vld [vmem:[#allocation2 + $0x50] sm:$0xff]
    %v473 = vld [vmem:[#allocation2 + $0x60] sm:$0xff]
    %v474 = vld [vmem:[#allocation2 + $0x70] sm:$0xff]
    %v475 = vld [vmem:[#allocation2 + $0xa0] sm:$0xff]
    %v476 = vld [vmem:[#allocation2 + $0xb0] sm:$0xff]
    %v477 = vld [vmem:[#allocation2 + $0xc0] sm:$0xff]
    %v478 = vld [vmem:[#allocation2 + $0xd0] sm:$0xff]
    %v479 = vld [vmem:[#allocation2 + $0xe0] sm:$0xff]
    %v480 = vld [vmem:[#allocation2 + $0xf0] sm:$0xff]
    %v481 = vld [vmem:[#allocation2 + $0x100] sm:$0xff]
    %v482 = vld [vmem:[#allocation2 + $0x110] sm:$0xff]
    %483 = vst.msk [vmem:[#allocation3] sm:$0xff] %vm220, %v467
    %484 = vst.msk [vmem:[#allocation3 + $0x18] sm:$0xff] %vm220, %v468
    %485 = vst.msk [vmem:[#allocation3 + $0x30] sm:$0xff] %vm220, %v469
    %486 = vst.msk [vmem:[#allocation3 + $0x48] sm:$0xff] %vm220, %v470
    %487 = vst.msk [vmem:[#allocation3 + $0x60] sm:$0xff] %vm220, %v471
    %488 = vst.msk [vmem:[#allocation3 + $0x78] sm:$0xff] %vm220, %v472
    %489 = vst.msk [vmem:[#allocation3 + $0x90] sm:$0xff] %vm220, %v473
    %490 = vst.msk [vmem:[#allocation3 + $0xa8] sm:$0xff] %vm220, %v474
    %491 = vst.msk [vmem:[#allocation3 + $0xc0] sm:$0xff] %vm220, %v475
    %492 = vst.msk [vmem:[#allocation3 + $0xd8] sm:$0xff] %vm220, %v476
    %493 = vst.msk [vmem:[#allocation3 + $0xf0] sm:$0xff] %vm220, %v477
    %494 = vst.msk [vmem:[#allocation3 + $0x108] sm:$0xff] %vm220, %v478
    %495 = vst.msk [vmem:[#allocation3 + $0x120] sm:$0xff] %vm220, %v479
    %496 = vst.msk [vmem:[#allocation3 + $0x138] sm:$0xff] %vm220, %v480
    %497 = vst.msk [vmem:[#allocation3 + $0x150] sm:$0xff] %vm220, %v481
    %498 = vst.msk [vmem:[#allocation3 + $0x168] sm:$0xff] %vm220, %v482
    %v499 = vld [vmem:[#allocation2 + $0x1] sm:$0xff]
    %v500 = vld [vmem:[#allocation2 + $0x11] sm:$0xff]
    %v501 = vld [vmem:[#allocation2 + $0x21] sm:$0xff]
    %v502 = vld [vmem:[#allocation2 + $0x31] sm:$0xff]
    %v503 = vld [vmem:[#allocation2 + $0x41] sm:$0xff]
    %v504 = vld [vmem:[#allocation2 + $0x51] sm:$0xff]
    %v505 = vld [vmem:[#allocation2 + $0x61] sm:$0xff]
    %v506 = vld [vmem:[#allocation2 + $0x71] sm:$0xff]
    %v507 = vld [vmem:[#allocation2 + $0xa1] sm:$0xff]
    %v508 = vld [vmem:[#allocation2 + $0xb1] sm:$0xff]
    %v509 = vld [vmem:[#allocation2 + $0xc1] sm:$0xff]
    %v510 = vld [vmem:[#allocation2 + $0xd1] sm:$0xff]
    %v511 = vld [vmem:[#allocation2 + $0xe1] sm:$0xff]
    %v512 = vld [vmem:[#allocation2 + $0xf1] sm:$0xff]
    %v513 = vld [vmem:[#allocation2 + $0x101] sm:$0xff]
    %v514 = vld [vmem:[#allocation2 + $0x111] sm:$0xff]
    %531 = vrot.lane.b32.xlu0 %v499, 32
    %v532 = vpop.permute.xlu0 %531
    %533 = vrot.lane.b32.xlu0 %v500, 32
    %v534 = vpop.permute.xlu0 %533
    %535 = vrot.lane.b32.xlu0 %v501, 32
    %v536 = vpop.permute.xlu0 %535
    %537 = vrot.lane.b32.xlu0 %v502, 32
    %v538 = vpop.permute.xlu0 %537
    %539 = vrot.lane.b32.xlu0 %v503, 32
    %v540 = vpop.permute.xlu0 %539
    %541 = vrot.lane.b32.xlu0 %v504, 32
    %v542 = vpop.permute.xlu0 %541
    %543 = vrot.lane.b32.xlu0 %v505, 32
    %v544 = vpop.permute.xlu0 %543
    %545 = vrot.lane.b32.xlu0 %v506, 32
    %v546 = vpop.permute.xlu0 %545
    %547 = vrot.lane.b32.xlu0 %v507, 32
    %v548 = vpop.permute.xlu0 %547
    %549 = vrot.lane.b32.xlu0 %v508, 32
    %v550 = vpop.permute.xlu0 %549
    %551 = vrot.lane.b32.xlu0 %v509, 32
    %v552 = vpop.permute.xlu0 %551
    %553 = vrot.lane.b32.xlu0 %v510, 32
    %v554 = vpop.permute.xlu0 %553
    %555 = vrot.lane.b32.xlu0 %v511, 32
    %v556 = vpop.permute.xlu0 %555
    %557 = vrot.lane.b32.xlu0 %v512, 32
    %v558 = vpop.permute.xlu0 %557
    %559 = vrot.lane.b32.xlu0 %v513, 32
    %v560 = vpop.permute.xlu0 %559
    %561 = vrot.lane.b32.xlu0 %v514, 32
    %v562 = vpop.permute.xlu0 %561
    %vm579 = vcmask 523520
    %580 = vst.msk [vmem:[#allocation3] sm:$0xff] %vm579, %v532
    %581 = vst.msk [vmem:[#allocation3 + $0x18] sm:$0xff] %vm579, %v534
    %582 = vst.msk [vmem:[#allocation3 + $0x30] sm:$0xff] %vm579, %v536
    %583 = vst.msk [vmem:[#allocation3 + $0x48] sm:$0xff] %vm579, %v538
    %584 = vst.msk [vmem:[#allocation3 + $0x60] sm:$0xff] %vm579, %v540
    %585 = vst.msk [vmem:[#allocation3 + $0x78] sm:$0xff] %vm579, %v542
    %586 = vst.msk [vmem:[#allocation3 + $0x90] sm:$0xff] %vm579, %v544
    %587 = vst.msk [vmem:[#allocation3 + $0xa8] sm:$0xff] %vm579, %v546
    %588 = vst.msk [vmem:[#allocation3 + $0xc0] sm:$0xff] %vm579, %v548
    %589 = vst.msk [vmem:[#allocation3 + $0xd8] sm:$0xff] %vm579, %v550
    %590 = vst.msk [vmem:[#allocation3 + $0xf0] sm:$0xff] %vm579, %v552
    %591 = vst.msk [vmem:[#allocation3 + $0x108] sm:$0xff] %vm579, %v554
    %592 = vst.msk [vmem:[#allocation3 + $0x120] sm:$0xff] %vm579, %v556
    %593 = vst.msk [vmem:[#allocation3 + $0x138] sm:$0xff] %vm579, %v558
    %594 = vst.msk [vmem:[#allocation3 + $0x150] sm:$0xff] %vm579, %v560
    %595 = vst.msk [vmem:[#allocation3 + $0x168] sm:$0xff] %vm579, %v562
    %v596 = vld [vmem:[#allocation2 + $0x2] sm:$0xff]
    %v597 = vld [vmem:[#allocation2 + $0x12] sm:$0xff]
    %v598 = vld [vmem:[#allocation2 + $0x22] sm:$0xff]
    %v599 = vld [vmem:[#allocation2 + $0x32] sm:$0xff]
    %v600 = vld [vmem:[#allocation2 + $0x42] sm:$0xff]
    %v601 = vld [vmem:[#allocation2 + $0x52] sm:$0xff]
    %v602 = vld [vmem:[#allocation2 + $0x62] sm:$0xff]
    %v603 = vld [vmem:[#allocation2 + $0x72] sm:$0xff]
    %v604 = vld [vmem:[#allocation2 + $0xa2] sm:$0xff]
    %v605 = vld [vmem:[#allocation2 + $0xb2] sm:$0xff]
    %v606 = vld [vmem:[#allocation2 + $0xc2] sm:$0xff]
    %v607 = vld [vmem:[#allocation2 + $0xd2] sm:$0xff]
    %v608 = vld [vmem:[#allocation2 + $0xe2] sm:$0xff]
    %v609 = vld [vmem:[#allocation2 + $0xf2] sm:$0xff]
    %v610 = vld [vmem:[#allocation2 + $0x102] sm:$0xff]
    %v611 = vld [vmem:[#allocation2 + $0x112] sm:$0xff]
    %628 = vrot.lane.b32.xlu0 %v596, 64
    %v629 = vpop.permute.xlu0 %628
    %630 = vrot.lane.b32.xlu0 %v597, 64
    %v631 = vpop.permute.xlu0 %630
    %632 = vrot.lane.b32.xlu0 %v598, 64
    %v633 = vpop.permute.xlu0 %632
    %634 = vrot.lane.b32.xlu0 %v599, 64
    %v635 = vpop.permute.xlu0 %634
    %636 = vrot.lane.b32.xlu0 %v600, 64
    %v637 = vpop.permute.xlu0 %636
    %638 = vrot.lane.b32.xlu0 %v601, 64
    %v639 = vpop.permute.xlu0 %638
    %640 = vrot.lane.b32.xlu0 %v602, 64
    %v641 = vpop.permute.xlu0 %640
    %642 = vrot.lane.b32.xlu0 %v603, 64
    %v643 = vpop.permute.xlu0 %642
    %644 = vrot.lane.b32.xlu0 %v604, 64
    %v645 = vpop.permute.xlu0 %644
    %646 = vrot.lane.b32.xlu0 %v605, 64
    %v647 = vpop.permute.xlu0 %646
    %648 = vrot.lane.b32.xlu0 %v606, 64
    %v649 = vpop.permute.xlu0 %648
    %650 = vrot.lane.b32.xlu0 %v607, 64
    %v651 = vpop.permute.xlu0 %650
    %652 = vrot.lane.b32.xlu0 %v608, 64
    %v653 = vpop.permute.xlu0 %652
    %654 = vrot.lane.b32.xlu0 %v609, 64
    %v655 = vpop.permute.xlu0 %654
    %656 = vrot.lane.b32.xlu0 %v610, 64
    %v657 = vpop.permute.xlu0 %656
    %658 = vrot.lane.b32.xlu0 %v611, 64
    %v659 = vpop.permute.xlu0 %658
    %vm676 = vcmask 785920
    %677 = vst.msk [vmem:[#allocation3] sm:$0xff] %vm676, %v629
    %678 = vst.msk [vmem:[#allocation3 + $0x18] sm:$0xff] %vm676, %v631
    %679 = vst.msk [vmem:[#allocation3 + $0x30] sm:$0xff] %vm676, %v633
    %680 = vst.msk [vmem:[#allocation3 + $0x48] sm:$0xff] %vm676, %v635
    %681 = vst.msk [vmem:[#allocation3 + $0x60] sm:$0xff] %vm676, %v637
    %682 = vst.msk [vmem:[#allocation3 + $0x78] sm:$0xff] %vm676, %v639
    %683 = vst.msk [vmem:[#allocation3 + $0x90] sm:$0xff] %vm676, %v641
    %684 = vst.msk [vmem:[#allocation3 + $0xa8] sm:$0xff] %vm676, %v643
    %685 = vst.msk [vmem:[#allocation3 + $0xc0] sm:$0xff] %vm676, %v645
    %686 = vst.msk [vmem:[#allocation3 + $0xd8] sm:$0xff] %vm676, %v647
    %687 = vst.msk [vmem:[#allocation3 + $0xf0] sm:$0xff] %vm676, %v649
    %688 = vst.msk [vmem:[#allocation3 + $0x108] sm:$0xff] %vm676, %v651
    %689 = vst.msk [vmem:[#allocation3 + $0x120] sm:$0xff] %vm676, %v653
    %690 = vst.msk [vmem:[#allocation3 + $0x138] sm:$0xff] %vm676, %v655
    %691 = vst.msk [vmem:[#allocation3 + $0x150] sm:$0xff] %vm676, %v657
    %692 = vst.msk [vmem:[#allocation3 + $0x168] sm:$0xff] %vm676, %v659
    %v693 = vld [vmem:[%s450] sm:$0xff]
    %v694 = vld [vmem:[%s450 + $0x10] sm:$0xff]
    %v695 = vld [vmem:[%s450 + $0x20] sm:$0xff]
    %v696 = vld [vmem:[%s450 + $0x30] sm:$0xff]
    %v697 = vld [vmem:[%s450 + $0x40] sm:$0xff]
    %v698 = vld [vmem:[%s450 + $0x50] sm:$0xff]
    %v699 = vld [vmem:[%s450 + $0x60] sm:$0xff]
    %v700 = vld [vmem:[%s450 + $0x70] sm:$0xff]
    %v701 = vld [vmem:[%s450 + $0xa0] sm:$0xff]
    %v702 = vld [vmem:[%s450 + $0xb0] sm:$0xff]
    %v703 = vld [vmem:[%s450 + $0xc0] sm:$0xff]
    %v704 = vld [vmem:[%s450 + $0xd0] sm:$0xff]
    %v705 = vld [vmem:[%s450 + $0xe0] sm:$0xff]
    %v706 = vld [vmem:[%s450 + $0xf0] sm:$0xff]
    %v707 = vld [vmem:[%s450 + $0x100] sm:$0xff]
    %v708 = vld [vmem:[%s450 + $0x110] sm:$0xff]
    %725 = vrot.lane.b32.xlu0 %v693, 96
    %v726 = vpop.permute.xlu0 %725
    %727 = vrot.lane.b32.xlu0 %v694, 96
    %v728 = vpop.permute.xlu0 %727
    %729 = vrot.lane.b32.xlu0 %v695, 96
    %v730 = vpop.permute.xlu0 %729
    %731 = vrot.lane.b32.xlu0 %v696, 96
    %v732 = vpop.permute.xlu0 %731
    %733 = vrot.lane.b32.xlu0 %v697, 96
    %v734 = vpop.permute.xlu0 %733
    %735 = vrot.lane.b32.xlu0 %v698, 96
    %v736 = vpop.permute.xlu0 %735
    %737 = vrot.lane.b32.xlu0 %v699, 96
    %v738 = vpop.permute.xlu0 %737
    %739 = vrot.lane.b32.xlu0 %v700, 96
    %v740 = vpop.permute.xlu0 %739
    %741 = vrot.lane.b32.xlu0 %v701, 96
    %v742 = vpop.permute.xlu0 %741
    %743 = vrot.lane.b32.xlu0 %v702, 96
    %v744 = vpop.permute.xlu0 %743
    %745 = vrot.lane.b32.xlu0 %v703, 96
    %v746 = vpop.permute.xlu0 %745
    %747 = vrot.lane.b32.xlu0 %v704, 96
    %v748 = vpop.permute.xlu0 %747
    %749 = vrot.lane.b32.xlu0 %v705, 96
    %v750 = vpop.permute.xlu0 %749
    %751 = vrot.lane.b32.xlu0 %v706, 96
    %v752 = vpop.permute.xlu0 %751
    %753 = vrot.lane.b32.xlu0 %v707, 96
    %v754 = vpop.permute.xlu0 %753
    %755 = vrot.lane.b32.xlu0 %v708, 96
    %v756 = vpop.permute.xlu0 %755
    %vm773 = vcmask 1048320
    %774 = vst.msk [vmem:[#allocation3] sm:$0xff] %vm773, %v726
    %775 = vst.msk [vmem:[#allocation3 + $0x18] sm:$0xff] %vm773, %v728
    %776 = vst.msk [vmem:[#allocation3 + $0x30] sm:$0xff] %vm773, %v730
    %777 = vst.msk [vmem:[#allocation3 + $0x48] sm:$0xff] %vm773, %v732
    %778 = vst.msk [vmem:[#allocation3 + $0x60] sm:$0xff] %vm773, %v734
    %779 = vst.msk [vmem:[#allocation3 + $0x78] sm:$0xff] %vm773, %v736
    %780 = vst.msk [vmem:[#allocation3 + $0x90] sm:$0xff] %vm773, %v738
    %781 = vst.msk [vmem:[#allocation3 + $0xa8] sm:$0xff] %vm773, %v740
    %782 = vst.msk [vmem:[#allocation3 + $0xc0] sm:$0xff] %vm773, %v742
    %783 = vst.msk [vmem:[#allocation3 + $0xd8] sm:$0xff] %vm773, %v744
    %784 = vst.msk [vmem:[#allocation3 + $0xf0] sm:$0xff] %vm773, %v746
    %785 = vst.msk [vmem:[#allocation3 + $0x108] sm:$0xff] %vm773, %v748
    %786 = vst.msk [vmem:[#allocation3 + $0x120] sm:$0xff] %vm773, %v750
    %787 = vst.msk [vmem:[#allocation3 + $0x138] sm:$0xff] %vm773, %v752
    %788 = vst.msk [vmem:[#allocation3 + $0x150] sm:$0xff] %vm773, %v754
    %789 = vst.msk [vmem:[#allocation3 + $0x168] sm:$0xff] %vm773, %v756
    %v790 = vld [vmem:[%s450 + $0x1] sm:$0xff]
    %v791 = vld [vmem:[%s450 + $0x11] sm:$0xff]
    %v792 = vld [vmem:[%s450 + $0x21] sm:$0xff]
    %v793 = vld [vmem:[%s450 + $0x31] sm:$0xff]
    %v794 = vld [vmem:[%s450 + $0x41] sm:$0xff]
    %v795 = vld [vmem:[%s450 + $0x51] sm:$0xff]
    %v796 = vld [vmem:[%s450 + $0x61] sm:$0xff]
    %v797 = vld [vmem:[%s450 + $0x71] sm:$0xff]
    %v798 = vld [vmem:[%s450 + $0xa1] sm:$0xff]
    %v799 = vld [vmem:[%s450 + $0xb1] sm:$0xff]
    %v800 = vld [vmem:[%s450 + $0xc1] sm:$0xff]
    %v801 = vld [vmem:[%s450 + $0xd1] sm:$0xff]
    %v802 = vld [vmem:[%s450 + $0xe1] sm:$0xff]
    %v803 = vld [vmem:[%s450 + $0xf1] sm:$0xff]
    %v804 = vld [vmem:[%s450 + $0x101] sm:$0xff]
    %v805 = vld [vmem:[%s450 + $0x111] sm:$0xff]
    %806 = vst.msk [vmem:[#allocation3 + $0x8] sm:$0xff] %vm220, %v790
    %807 = vst.msk [vmem:[#allocation3 + $0x20] sm:$0xff] %vm220, %v791
    %808 = vst.msk [vmem:[#allocation3 + $0x38] sm:$0xff] %vm220, %v792
    %809 = vst.msk [vmem:[#allocation3 + $0x50] sm:$0xff] %vm220, %v793
    %810 = vst.msk [vmem:[#allocation3 + $0x68] sm:$0xff] %vm220, %v794
    %811 = vst.msk [vmem:[#allocation3 + $0x80] sm:$0xff] %vm220, %v795
    %812 = vst.msk [vmem:[#allocation3 + $0x98] sm:$0xff] %vm220, %v796
    %813 = vst.msk [vmem:[#allocation3 + $0xb0] sm:$0xff] %vm220, %v797
    %814 = vst.msk [vmem:[#allocation3 + $0xc8] sm:$0xff] %vm220, %v798
    %815 = vst.msk [vmem:[#allocation3 + $0xe0] sm:$0xff] %vm220, %v799
    %816 = vst.msk [vmem:[#allocation3 + $0xf8] sm:$0xff] %vm220, %v800
    %817 = vst.msk [vmem:[#allocation3 + $0x110] sm:$0xff] %vm220, %v801
    %818 = vst.msk [vmem:[#allocation3 + $0x128] sm:$0xff] %vm220, %v802
    %819 = vst.msk [vmem:[#allocation3 + $0x140] sm:$0xff] %vm220, %v803
    %820 = vst.msk [vmem:[#allocation3 + $0x158] sm:$0xff] %vm220, %v804
    %821 = vst.msk [vmem:[#allocation3 + $0x170] sm:$0xff] %vm220, %v805
    %v822 = vld [vmem:[%s450 + $0x2] sm:$0xff]
    %v823 = vld [vmem:[%s450 + $0x12] sm:$0xff]
    %v824 = vld [vmem:[%s450 + $0x22] sm:$0xff]
    %v825 = vld [vmem:[%s450 + $0x32] sm:$0xff]
    %v826 = vld [vmem:[%s450 + $0x42] sm:$0xff]
    %v827 = vld [vmem:[%s450 + $0x52] sm:$0xff]
    %v828 = vld [vmem:[%s450 + $0x62] sm:$0xff]
    %v829 = vld [vmem:[%s450 + $0x72] sm:$0xff]
    %v830 = vld [vmem:[%s450 + $0xa2] sm:$0xff]
    %v831 = vld [vmem:[%s450 + $0xb2] sm:$0xff]
    %v832 = vld [vmem:[%s450 + $0xc2] sm:$0xff]
    %v833 = vld [vmem:[%s450 + $0xd2] sm:$0xff]
    %v834 = vld [vmem:[%s450 + $0xe2] sm:$0xff]
    %v835 = vld [vmem:[%s450 + $0xf2] sm:$0xff]
    %v836 = vld [vmem:[%s450 + $0x102] sm:$0xff]
    %v837 = vld [vmem:[%s450 + $0x112] sm:$0xff]
    %854 = vrot.lane.b32.xlu0 %v822, 32
    %v855 = vpop.permute.xlu0 %854
    %856 = vrot.lane.b32.xlu0 %v823, 32
    %v857 = vpop.permute.xlu0 %856
    %858 = vrot.lane.b32.xlu0 %v824, 32
    %v859 = vpop.permute.xlu0 %858
    %860 = vrot.lane.b32.xlu0 %v825, 32
    %v861 = vpop.permute.xlu0 %860
    %862 = vrot.lane.b32.xlu0 %v826, 32
    %v863 = vpop.permute.xlu0 %862
    %864 = vrot.lane.b32.xlu0 %v827, 32
    %v865 = vpop.permute.xlu0 %864
    %866 = vrot.lane.b32.xlu0 %v828, 32
    %v867 = vpop.permute.xlu0 %866
    %868 = vrot.lane.b32.xlu0 %v829, 32
    %v869 = vpop.permute.xlu0 %868
    %870 = vrot.lane.b32.xlu0 %v830, 32
    %v871 = vpop.permute.xlu0 %870
    %872 = vrot.lane.b32.xlu0 %v831, 32
    %v873 = vpop.permute.xlu0 %872
    %874 = vrot.lane.b32.xlu0 %v832, 32
    %v875 = vpop.permute.xlu0 %874
    %876 = vrot.lane.b32.xlu0 %v833, 32
    %v877 = vpop.permute.xlu0 %876
    %878 = vrot.lane.b32.xlu0 %v834, 32
    %v879 = vpop.permute.xlu0 %878
    %880 = vrot.lane.b32.xlu0 %v835, 32
    %v881 = vpop.permute.xlu0 %880
    %882 = vrot.lane.b32.xlu0 %v836, 32
    %v883 = vpop.permute.xlu0 %882
    %884 = vrot.lane.b32.xlu0 %v837, 32
    %v885 = vpop.permute.xlu0 %884
    %902 = vst.msk [vmem:[#allocation3 + $0x8] sm:$0xff] %vm579, %v855
    %903 = vst.msk [vmem:[#allocation3 + $0x20] sm:$0xff] %vm579, %v857
    %904 = vst.msk [vmem:[#allocation3 + $0x38] sm:$0xff] %vm579, %v859
    %905 = vst.msk [vmem:[#allocation3 + $0x50] sm:$0xff] %vm579, %v861
    %906 = vst.msk [vmem:[#allocation3 + $0x68] sm:$0xff] %vm579, %v863
    %907 = vst.msk [vmem:[#allocation3 + $0x80] sm:$0xff] %vm579, %v865
    %908 = vst.msk [vmem:[#allocation3 + $0x98] sm:$0xff] %vm579, %v867
    %909 = vst.msk [vmem:[#allocation3 + $0xb0] sm:$0xff] %vm579, %v869
    %910 = vst.msk [vmem:[#allocation3 + $0xc8] sm:$0xff] %vm579, %v871
    %911 = vst.msk [vmem:[#allocation3 + $0xe0] sm:$0xff] %vm579, %v873
    %912 = vst.msk [vmem:[#allocation3 + $0xf8] sm:$0xff] %vm579, %v875
    %913 = vst.msk [vmem:[#allocation3 + $0x110] sm:$0xff] %vm579, %v877
    %914 = vst.msk [vmem:[#allocation3 + $0x128] sm:$0xff] %vm579, %v879
    %915 = vst.msk [vmem:[#allocation3 + $0x140] sm:$0xff] %vm579, %v881
    %916 = vst.msk [vmem:[#allocation3 + $0x158] sm:$0xff] %vm579, %v883
    %917 = vst.msk [vmem:[#allocation3 + $0x170] sm:$0xff] %vm579, %v885
    %s918 = scalar_lea.vmem [#allocation2], 32
    %v919 = vld [vmem:[%s918] sm:$0xff]
    %v920 = vld [vmem:[%s918 + $0x10] sm:$0xff]
    %v921 = vld [vmem:[%s918 + $0x20] sm:$0xff]
    %v922 = vld [vmem:[%s918 + $0x30] sm:$0xff]
    %v923 = vld [vmem:[%s918 + $0x40] sm:$0xff]
    %v924 = vld [vmem:[%s918 + $0x50] sm:$0xff]
    %v925 = vld [vmem:[%s918 + $0x60] sm:$0xff]
    %v926 = vld [vmem:[%s918 + $0x70] sm:$0xff]
    %v927 = vld [vmem:[%s918 + $0xa0] sm:$0xff]
    %v928 = vld [vmem:[%s918 + $0xb0] sm:$0xff]
    %v929 = vld [vmem:[%s918 + $0xc0] sm:$0xff]
    %v930 = vld [vmem:[%s918 + $0xd0] sm:$0xff]
    %v931 = vld [vmem:[%s918 + $0xe0] sm:$0xff]
    %v932 = vld [vmem:[%s918 + $0xf0] sm:$0xff]
    %v933 = vld [vmem:[%s918 + $0x100] sm:$0xff]
    %v934 = vld [vmem:[%s918 + $0x110] sm:$0xff]
    %951 = vrot.lane.b32.xlu0 %v919, 64
    %v952 = vpop.permute.xlu0 %951
    %953 = vrot.lane.b32.xlu0 %v920, 64
    %v954 = vpop.permute.xlu0 %953
    %955 = vrot.lane.b32.xlu0 %v921, 64
    %v956 = vpop.permute.xlu0 %955
    %957 = vrot.lane.b32.xlu0 %v922, 64
    %v958 = vpop.permute.xlu0 %957
    %959 = vrot.lane.b32.xlu0 %v923, 64
    %v960 = vpop.permute.xlu0 %959
    %961 = vrot.lane.b32.xlu0 %v924, 64
    %v962 = vpop.permute.xlu0 %961
    %963 = vrot.lane.b32.xlu0 %v925, 64
    %v964 = vpop.permute.xlu0 %963
    %965 = vrot.lane.b32.xlu0 %v926, 64
    %v966 = vpop.permute.xlu0 %965
    %967 = vrot.lane.b32.xlu0 %v927, 64
    %v968 = vpop.permute.xlu0 %967
    %969 = vrot.lane.b32.xlu0 %v928, 64
    %v970 = vpop.permute.xlu0 %969
    %971 = vrot.lane.b32.xlu0 %v929, 64
    %v972 = vpop.permute.xlu0 %971
    %973 = vrot.lane.b32.xlu0 %v930, 64
    %v974 = vpop.permute.xlu0 %973
    %975 = vrot.lane.b32.xlu0 %v931, 64
    %v976 = vpop.permute.xlu0 %975
    %977 = vrot.lane.b32.xlu0 %v932, 64
    %v978 = vpop.permute.xlu0 %977
    %979 = vrot.lane.b32.xlu0 %v933, 64
    %v980 = vpop.permute.xlu0 %979
    %981 = vrot.lane.b32.xlu0 %v934, 64
    %v982 = vpop.permute.xlu0 %981
    %999 = vst.msk [vmem:[#allocation3 + $0x8] sm:$0xff] %vm676, %v952
    %1000 = vst.msk [vmem:[#allocation3 + $0x20] sm:$0xff] %vm676, %v954
    %1001 = vst.msk [vmem:[#allocation3 + $0x38] sm:$0xff] %vm676, %v956
    %1002 = vst.msk [vmem:[#allocation3 + $0x50] sm:$0xff] %vm676, %v958
    %1003 = vst.msk [vmem:[#allocation3 + $0x68] sm:$0xff] %vm676, %v960
    %1004 = vst.msk [vmem:[#allocation3 + $0x80] sm:$0xff] %vm676, %v962
    %1005 = vst.msk [vmem:[#allocation3 + $0x98] sm:$0xff] %vm676, %v964
    %1006 = vst.msk [vmem:[#allocation3 + $0xb0] sm:$0xff] %vm676, %v966
    %1007 = vst.msk [vmem:[#allocation3 + $0xc8] sm:$0xff] %vm676, %v968
    %1008 = vst.msk [vmem:[#allocation3 + $0xe0] sm:$0xff] %vm676, %v970
    %1009 = vst.msk [vmem:[#allocation3 + $0xf8] sm:$0xff] %vm676, %v972
    %1010 = vst.msk [vmem:[#allocation3 + $0x110] sm:$0xff] %vm676, %v974
    %1011 = vst.msk [vmem:[#allocation3 + $0x128] sm:$0xff] %vm676, %v976
    %1012 = vst.msk [vmem:[#allocation3 + $0x140] sm:$0xff] %vm676, %v978
    %1013 = vst.msk [vmem:[#allocation3 + $0x158] sm:$0xff] %vm676, %v980
    %1014 = vst.msk [vmem:[#allocation3 + $0x170] sm:$0xff] %vm676, %v982
    %v1015 = vld [vmem:[%s918 + $0x1] sm:$0xff]
    %v1016 = vld [vmem:[%s918 + $0x11] sm:$0xff]
    %v1017 = vld [vmem:[%s918 + $0x21] sm:$0xff]
    %v1018 = vld [vmem:[%s918 + $0x31] sm:$0xff]
    %v1019 = vld [vmem:[%s918 + $0x41] sm:$0xff]
    %v1020 = vld [vmem:[%s918 + $0x51] sm:$0xff]
    %v1021 = vld [vmem:[%s918 + $0x61] sm:$0xff]
    %v1022 = vld [vmem:[%s918 + $0x71] sm:$0xff]
    %v1023 = vld [vmem:[%s918 + $0xa1] sm:$0xff]
    %v1024 = vld [vmem:[%s918 + $0xb1] sm:$0xff]
    %v1025 = vld [vmem:[%s918 + $0xc1] sm:$0xff]
    %v1026 = vld [vmem:[%s918 + $0xd1] sm:$0xff]
    %v1027 = vld [vmem:[%s918 + $0xe1] sm:$0xff]
    %v1028 = vld [vmem:[%s918 + $0xf1] sm:$0xff]
    %v1029 = vld [vmem:[%s918 + $0x101] sm:$0xff]
    %v1030 = vld [vmem:[%s918 + $0x111] sm:$0xff]
    %1047 = vrot.lane.b32.xlu0 %v1015, 96
    %v1048 = vpop.permute.xlu0 %1047
    %1049 = vrot.lane.b32.xlu0 %v1016, 96
    %v1050 = vpop.permute.xlu0 %1049
    %1051 = vrot.lane.b32.xlu0 %v1017, 96
    %v1052 = vpop.permute.xlu0 %1051
    %1053 = vrot.lane.b32.xlu0 %v1018, 96
    %v1054 = vpop.permute.xlu0 %1053
    %1055 = vrot.lane.b32.xlu0 %v1019, 96
    %v1056 = vpop.permute.xlu0 %1055
    %1057 = vrot.lane.b32.xlu0 %v1020, 96
    %v1058 = vpop.permute.xlu0 %1057
    %1059 = vrot.lane.b32.xlu0 %v1021, 96
    %v1060 = vpop.permute.xlu0 %1059
    %1061 = vrot.lane.b32.xlu0 %v1022, 96
    %v1062 = vpop.permute.xlu0 %1061
    %1063 = vrot.lane.b32.xlu0 %v1023, 96
    %v1064 = vpop.permute.xlu0 %1063
    %1065 = vrot.lane.b32.xlu0 %v1024, 96
    %v1066 = vpop.permute.xlu0 %1065
    %1067 = vrot.lane.b32.xlu0 %v1025, 96
    %v1068 = vpop.permute.xlu0 %1067
    %1069 = vrot.lane.b32.xlu0 %v1026, 96
    %v1070 = vpop.permute.xlu0 %1069
    %1071 = vrot.lane.b32.xlu0 %v1027, 96
    %v1072 = vpop.permute.xlu0 %1071
    %1073 = vrot.lane.b32.xlu0 %v1028, 96
    %v1074 = vpop.permute.xlu0 %1073
    %1075 = vrot.lane.b32.xlu0 %v1029, 96
    %v1076 = vpop.permute.xlu0 %1075
    %1077 = vrot.lane.b32.xlu0 %v1030, 96
    %v1078 = vpop.permute.xlu0 %1077
    %1095 = vst.msk [vmem:[#allocation3 + $0x8] sm:$0xff] %vm773, %v1048
    %1096 = vst.msk [vmem:[#allocation3 + $0x20] sm:$0xff] %vm773, %v1050
    %1097 = vst.msk [vmem:[#allocation3 + $0x38] sm:$0xff] %vm773, %v1052
    %1098 = vst.msk [vmem:[#allocation3 + $0x50] sm:$0xff] %vm773, %v1054
    %1099 = vst.msk [vmem:[#allocation3 + $0x68] sm:$0xff] %vm773, %v1056
    %1100 = vst.msk [vmem:[#allocation3 + $0x80] sm:$0xff] %vm773, %v1058
    %1101 = vst.msk [vmem:[#allocation3 + $0x98] sm:$0xff] %vm773, %v1060
    %1102 = vst.msk [vmem:[#allocation3 + $0xb0] sm:$0xff] %vm773, %v1062
    %1103 = vst.msk [vmem:[#allocation3 + $0xc8] sm:$0xff] %vm773, %v1064
    %1104 = vst.msk [vmem:[#allocation3 + $0xe0] sm:$0xff] %vm773, %v1066
    %1105 = vst.msk [vmem:[#allocation3 + $0xf8] sm:$0xff] %vm773, %v1068
    %1106 = vst.msk [vmem:[#allocation3 + $0x110] sm:$0xff] %vm773, %v1070
    %1107 = vst.msk [vmem:[#allocation3 + $0x128] sm:$0xff] %vm773, %v1072
    %1108 = vst.msk [vmem:[#allocation3 + $0x140] sm:$0xff] %vm773, %v1074
    %1109 = vst.msk [vmem:[#allocation3 + $0x158] sm:$0xff] %vm773, %v1076
    %1110 = vst.msk [vmem:[#allocation3 + $0x170] sm:$0xff] %vm773, %v1078
    %v1111 = vld [vmem:[%s918 + $0x2] sm:$0xff]
    %v1112 = vld [vmem:[%s918 + $0x12] sm:$0xff]
    %v1113 = vld [vmem:[%s918 + $0x22] sm:$0xff]
    %v1114 = vld [vmem:[%s918 + $0x32] sm:$0xff]
    %v1115 = vld [vmem:[%s918 + $0x42] sm:$0xff]
    %v1116 = vld [vmem:[%s918 + $0x52] sm:$0xff]
    %v1117 = vld [vmem:[%s918 + $0x62] sm:$0xff]
    %v1118 = vld [vmem:[%s918 + $0x72] sm:$0xff]
    %v1119 = vld [vmem:[%s918 + $0xa2] sm:$0xff]
    %v1120 = vld [vmem:[%s918 + $0xb2] sm:$0xff]
    %v1121 = vld [vmem:[%s918 + $0xc2] sm:$0xff]
    %v1122 = vld [vmem:[%s918 + $0xd2] sm:$0xff]
    %v1123 = vld [vmem:[%s918 + $0xe2] sm:$0xff]
    %v1124 = vld [vmem:[%s918 + $0xf2] sm:$0xff]
    %v1125 = vld [vmem:[%s918 + $0x102] sm:$0xff]
    %v1126 = vld [vmem:[%s918 + $0x112] sm:$0xff]
    %1127 = vst.msk [vmem:[#allocation3 + $0x10] sm:$0xff] %vm220, %v1111
    %1128 = vst.msk [vmem:[#allocation3 + $0x28] sm:$0xff] %vm220, %v1112
    %1129 = vst.msk [vmem:[#allocation3 + $0x40] sm:$0xff] %vm220, %v1113
    %1130 = vst.msk [vmem:[#allocation3 + $0x58] sm:$0xff] %vm220, %v1114
    %1131 = vst.msk [vmem:[#allocation3 + $0x70] sm:$0xff] %vm220, %v1115
    %1132 = vst.msk [vmem:[#allocation3 + $0x88] sm:$0xff] %vm220, %v1116
    %1133 = vst.msk [vmem:[#allocation3 + $0xa0] sm:$0xff] %vm220, %v1117
    %1134 = vst.msk [vmem:[#allocation3 + $0xb8] sm:$0xff] %vm220, %v1118
    %1135 = vst.msk [vmem:[#allocation3 + $0xd0] sm:$0xff] %vm220, %v1119
    %1136 = vst.msk [vmem:[#allocation3 + $0xe8] sm:$0xff] %vm220, %v1120
    %1137 = vst.msk [vmem:[#allocation3 + $0x100] sm:$0xff] %vm220, %v1121
    %1138 = vst.msk [vmem:[#allocation3 + $0x118] sm:$0xff] %vm220, %v1122
    %1139 = vst.msk [vmem:[#allocation3 + $0x130] sm:$0xff] %vm220, %v1123
    %1140 = vst.msk [vmem:[#allocation3 + $0x148] sm:$0xff] %vm220, %v1124
    %1141 = vst.msk [vmem:[#allocation3 + $0x160] sm:$0xff] %vm220, %v1125
    %1142 = vst.msk [vmem:[#allocation3 + $0x178] sm:$0xff] %vm220, %v1126
    %v1143 = vld [vmem:[#allocation3] sm:$0xff]
    %v1144 = vld [vmem:[#allocation3 + $0x8] sm:$0xff]
    %v1145 = vld [vmem:[#allocation3 + $0x10] sm:$0xff]
    %v1146 = vld [vmem:[#allocation3 + $0x18] sm:$0xff]
    %v1147 = vld [vmem:[#allocation3 + $0x20] sm:$0xff]
    %v1148 = vld [vmem:[#allocation3 + $0x28] sm:$0xff]
    %v1149 = vld [vmem:[#allocation3 + $0x30] sm:$0xff]
    %v1150 = vld [vmem:[#allocation3 + $0x38] sm:$0xff]
    %v1151 = vld [vmem:[#allocation3 + $0x40] sm:$0xff]
    %v1152 = vld [vmem:[#allocation3 + $0x48] sm:$0xff]
    %v1153 = vld [vmem:[#allocation3 + $0x50] sm:$0xff]
    %v1154 = vld [vmem:[#allocation3 + $0x58] sm:$0xff]
    %v1155 = vld [vmem:[#allocation3 + $0x60] sm:$0xff]
    %v1156 = vld [vmem:[#allocation3 + $0x68] sm:$0xff]
    %v1157 = vld [vmem:[#allocation3 + $0x70] sm:$0xff]
    %v1158 = vld [vmem:[#allocation3 + $0x78] sm:$0xff]
    %v1159 = vld [vmem:[#allocation3 + $0x80] sm:$0xff]
    %v1160 = vld [vmem:[#allocation3 + $0x88] sm:$0xff]
    %v1161 = vld [vmem:[#allocation3 + $0x90] sm:$0xff]
    %v1162 = vld [vmem:[#allocation3 + $0x98] sm:$0xff]
    %v1163 = vld [vmem:[#allocation3 + $0xa0] sm:$0xff]
    %v1164 = vld [vmem:[#allocation3 + $0xa8] sm:$0xff]
    %v1165 = vld [vmem:[#allocation3 + $0xb0] sm:$0xff]
    %v1166 = vld [vmem:[#allocation3 + $0xb8] sm:$0xff]
    %v1167 = vld [vmem:[#allocation3 + $0xc0] sm:$0xff]
    %v1168 = vld [vmem:[#allocation3 + $0xc8] sm:$0xff]
    %v1169 = vld [vmem:[#allocation3 + $0xd0] sm:$0xff]
    %v1170 = vld [vmem:[#allocation3 + $0xd8] sm:$0xff]
    %v1171 = vld [vmem:[#allocation3 + $0xe0] sm:$0xff]
    %v1172 = vld [vmem:[#allocation3 + $0xe8] sm:$0xff]
    %v1173 = vld [vmem:[#allocation3 + $0xf0] sm:$0xff]
    %v1174 = vld [vmem:[#allocation3 + $0xf8] sm:$0xff]
    %v1175 = vld [vmem:[#allocation3 + $0x100] sm:$0xff]
    %v1176 = vld [vmem:[#allocation3 + $0x108] sm:$0xff]
    %v1177 = vld [vmem:[#allocation3 + $0x110] sm:$0xff]
    %v1178 = vld [vmem:[#allocation3 + $0x118] sm:$0xff]
    %v1179 = vld [vmem:[#allocation3 + $0x120] sm:$0xff]
    %v1180 = vld [vmem:[#allocation3 + $0x128] sm:$0xff]
    %v1181 = vld [vmem:[#allocation3 + $0x130] sm:$0xff]
    %v1182 = vld [vmem:[#allocation3 + $0x138] sm:$0xff]
    %v1183 = vld [vmem:[#allocation3 + $0x140] sm:$0xff]
    %v1184 = vld [vmem:[#allocation3 + $0x148] sm:$0xff]
    %v1185 = vld [vmem:[#allocation3 + $0x150] sm:$0xff]
    %v1186 = vld [vmem:[#allocation3 + $0x158] sm:$0xff]
    %v1187 = vld [vmem:[#allocation3 + $0x160] sm:$0xff]
    %v1188 = vld [vmem:[#allocation3 + $0x168] sm:$0xff]
    %v1189 = vld [vmem:[#allocation3 + $0x170] sm:$0xff]
    %v1190 = vld [vmem:[#allocation3 + $0x178] sm:$0xff]
    %v1191 = vpack.c.bf16 %v1146, %v1143
    %v1192 = vpack.c.bf16 %v1147, %v1144
    %v1193 = vpack.c.bf16 %v1148, %v1145
    %v1194 = vpack.c.bf16 %v1152, %v1149
    %v1195 = vpack.c.bf16 %v1153, %v1150
    %v1196 = vpack.c.bf16 %v1154, %v1151
    %v1197 = vpack.c.bf16 %v1158, %v1155
    %v1198 = vpack.c.bf16 %v1159, %v1156
    %v1199 = vpack.c.bf16 %v1160, %v1157
    %v1200 = vpack.c.bf16 %v1164, %v1161
    %v1201 = vpack.c.bf16 %v1165, %v1162
    %v1202 = vpack.c.bf16 %v1166, %v1163
    %v1203 = vpack.c.bf16 %v1170, %v1167
    %v1204 = vpack.c.bf16 %v1171, %v1168
    %v1205 = vpack.c.bf16 %v1172, %v1169
    %v1206 = vpack.c.bf16 %v1176, %v1173
    %v1207 = vpack.c.bf16 %v1177, %v1174
    %v1208 = vpack.c.bf16 %v1178, %v1175
    %v1209 = vpack.c.bf16 %v1182, %v1179
    %v1210 = vpack.c.bf16 %v1183, %v1180
    %v1211 = vpack.c.bf16 %v1184, %v1181
    %v1212 = vpack.c.bf16 %v1188, %v1185
    %v1213 = vpack.c.bf16 %v1189, %v1186
    %v1214 = vpack.c.bf16 %v1190, %v1187
    %v1215 = vld [vmem:[%s5] sm:$0xf]
    %v1216 = vld [vmem:[%s5 + $0x4] sm:$0xf]
    %v1217 = vld [vmem:[%s5 + $0x8] sm:$0xf]
    %v1218 = vld [vmem:[%s5 + $0xc] sm:$0xf]
    %v1219 = vld [vmem:[%s5 + $0x10] sm:$0xf]
    %v1220 = vld [vmem:[%s5 + $0x14] sm:$0xf]
    %v1221 = vld [vmem:[%s5 + $0x18] sm:$0xf]
    %v1222 = vld [vmem:[%s5 + $0x1c] sm:$0xf]
    %v1223 = vld [vmem:[%s5 + $0x20] sm:$0xf]
    %v1224 = vld [vmem:[%s5 + $0x24] sm:$0xf]
    %v1225 = vld [vmem:[%s5 + $0x28] sm:$0xf]
    %v1226 = vld [vmem:[%s5 + $0x2c] sm:$0xf]
    %v1227 = vld [vmem:[%s5 + $0x30] sm:$0xf]
    %v1228 = vld [vmem:[%s5 + $0x34] sm:$0xf]
    %v1229 = vld [vmem:[%s5 + $0x38] sm:$0xf]
    %v1230 = vld [vmem:[%s5 + $0x3c] sm:$0xf]
    %v1231 = vld [vmem:[%s5 + $0x40] sm:$0xf]
    %v1232 = vld [vmem:[%s5 + $0x44] sm:$0xf]
    %v1233 = vld [vmem:[%s5 + $0x48] sm:$0xf]
    %v1234 = vld [vmem:[%s5 + $0x4c] sm:$0xf]
    %v1235 = vld [vmem:[%s5 + $0x50] sm:$0xf]
    %v1236 = vld [vmem:[%s5 + $0x54] sm:$0xf]
    %v1237 = vld [vmem:[%s5 + $0x58] sm:$0xf]
    %v1238 = vld [vmem:[%s5 + $0x5c] sm:$0xf]
    %v1239 = vld [vmem:[%s5 + $0x60] sm:$0xf]
    %v1240 = vld [vmem:[%s5 + $0x64] sm:$0xf]
    %v1241 = vld [vmem:[%s5 + $0x68] sm:$0xf]
    %v1242 = vld [vmem:[%s5 + $0x6c] sm:$0xf]
    %v1243 = vld [vmem:[%s5 + $0x70] sm:$0xf]
    %v1244 = vld [vmem:[%s5 + $0x74] sm:$0xf]
    %v1245 = vld [vmem:[%s5 + $0x78] sm:$0xf]
    %v1246 = vld [vmem:[%s5 + $0x7c] sm:$0xf]
    %v1247 = vld [vmem:[%s5 + $0x80] sm:$0xf]
    %v1248 = vld [vmem:[%s5 + $0x84] sm:$0xf]
    %v1249 = vld [vmem:[%s5 + $0x88] sm:$0xf]
    %v1250 = vld [vmem:[%s5 + $0x8c] sm:$0xf]
    %v1287 = vunpack.c.l.b16 %v1215
    %v1288 = vunpack.c.l.b16 %v1216
    %v1289 = vunpack.c.l.b16 %v1217
    %v1290 = vunpack.c.l.b16 %v1218
    %v1291 = vunpack.c.l.b16 %v1219
    %v1292 = vunpack.c.l.b16 %v1220
    %v1293 = vunpack.c.l.b16 %v1221
    %v1294 = vunpack.c.l.b16 %v1222
    %v1295 = vunpack.c.l.b16 %v1223
    %v1296 = vunpack.c.l.b16 %v1224
    %v1297 = vunpack.c.l.b16 %v1225
    %v1298 = vunpack.c.l.b16 %v1226
    %v1299 = vunpack.c.l.b16 %v1227
    %v1300 = vunpack.c.l.b16 %v1228
    %v1301 = vunpack.c.l.b16 %v1229
    %v1302 = vunpack.c.l.b16 %v1230
    %v1303 = vunpack.c.l.b16 %v1231
    %v1304 = vunpack.c.l.b16 %v1232
    %v1305 = vunpack.c.l.b16 %v1233
    %v1306 = vunpack.c.l.b16 %v1234
    %v1307 = vunpack.c.l.b16 %v1235
    %v1308 = vunpack.c.l.b16 %v1236
    %v1309 = vunpack.c.l.b16 %v1237
    %v1310 = vunpack.c.l.b16 %v1238
    %v1311 = vunpack.c.l.b16 %v1239
    %v1312 = vunpack.c.l.b16 %v1240
    %v1313 = vunpack.c.l.b16 %v1241
    %v1314 = vunpack.c.l.b16 %v1242
    %v1315 = vunpack.c.l.b16 %v1243
    %v1316 = vunpack.c.l.b16 %v1244
    %v1317 = vunpack.c.l.b16 %v1245
    %v1318 = vunpack.c.l.b16 %v1246
    %v1319 = vunpack.c.l.b16 %v1247
    %v1320 = vunpack.c.l.b16 %v1248
    %v1321 = vunpack.c.l.b16 %v1249
    %v1322 = vunpack.c.l.b16 %v1250
    %v1323 = vpack.c.b16 %v1288, %v1287
    %v1324 = vpack.c.b16 %v1290, %v1289
    %v1325 = vpack.c.b16 %v1292, %v1291
    %v1326 = vpack.c.b16 %v1294, %v1293
    %v1327 = vpack.c.b16 %v1296, %v1295
    %v1328 = vpack.c.b16 %v1298, %v1297
    %v1329 = vpack.c.b16 %v1300, %v1299
    %v1330 = vpack.c.b16 %v1302, %v1301
    %v1331 = vpack.c.b16 %v1304, %v1303
    %v1332 = vpack.c.b16 %v1306, %v1305
    %v1333 = vpack.c.b16 %v1308, %v1307
    %v1334 = vpack.c.b16 %v1310, %v1309
    %v1335 = vpack.c.b16 %v1312, %v1311
    %v1336 = vpack.c.b16 %v1314, %v1313
    %v1337 = vpack.c.b16 %v1316, %v1315
    %v1338 = vpack.c.b16 %v1318, %v1317
    %v1339 = vpack.c.b16 %v1320, %v1319
    %v1340 = vpack.c.b16 %v1322, %v1321
    %v1360 = vsel %vm220, %v1193, 0
    %v1363 = vsel %vm220, %v1196, 0
    %v1366 = vsel %vm220, %v1199, 0
    %v1369 = vsel %vm220, %v1202, 0
    %v1372 = vsel %vm220, %v1205, 0
    %v1375 = vsel %vm220, %v1208, 0
    %v1378 = vsel %vm220, %v1211, 0
    %v1381 = vsel %vm220, %v1214, 0
    %1383 = vmatprep.subr.bf16.mxu0 0
    %1384 = vmatpush1.bf16.msra.mxu0 %v1323
    %1385 = vmatprep.subr.bf16.mxu0 0
    %1386 = vmatpush1.bf16.msra.mxu0 %v1324
    %1387 = vmatprep.subr.bf16.mxu0 0
    %1388 = vmatpush1.bf16.msra.mxu0 %v1325
    %1389 = vmatprep.subr.bf16.mxu0 0
    %1390 = vmatpush1.bf16.msra.mxu0 %v1326
    %1391 = vmatprep.subr.bf16.mxu0 0
    %1392 = vmatpush1.bf16.msra.mxu0 %v1327
    %1393 = vmatprep.subr.bf16.mxu0 0
    %1394 = vmatpush1.bf16.msra.mxu0 %v1328
    %1395 = vmatprep.subr.bf16.mxu0 0
    %1396 = vmatpush1.bf16.msra.mxu0 %v1329
    %1397 = vmatprep.subr.bf16.mxu0 0
    %1398 = vmatpush1.bf16.msra.mxu0 %v1330
    %1399 = vmatprep.subr.bf16.mxu0 0
    %1400 = vmatpush1.bf16.msra.mxu0 %v1331
    %1401 = vmatprep.subr.bf16.mxu0 0
    %1402 = vmatpush1.bf16.msra.mxu0 %v1332
    %1403 = vmatprep.subr.bf16.mxu0 0
    %1404 = vmatpush1.bf16.msra.mxu0 %v1333
    %1405 = vmatprep.subr.bf16.mxu0 0
    %1406 = vmatpush1.bf16.msra.mxu0 %v1334
    %1407 = vmatprep.subr.bf16.mxu0 0
    %1408 = vmatpush1.bf16.msra.mxu0 %v1335
    %1409 = vmatprep.subr.bf16.mxu0 0
    %1410 = vmatpush1.bf16.msra.mxu0 %v1336
    %1411 = vmatprep.subr.bf16.mxu0 0
    %1412 = vmatpush1.bf16.msra.mxu0 %v1337
    %1413 = vmatprep.subr.bf16.mxu0 0
    %1414 = vmatpush1.bf16.msra.mxu0 %v1338
    %1415 = vmatprep.mubr.bf16.mxu0 %v1192
    %1416 = vmatmul.mubr.bf16.gmra.mrb[0].mxu0 %v1191
    %v1417 = vpop.f32.mrb[0].mxu0
    %v1418 = vadd.f32 0.0, %v1417
    %v1419 = vpop.f32.mrb[0].mxu0
    %v1420 = vpop.f32.mrb[0].mxu0
    %v1421 = vadd.f32 0.0, %v1420
    %v1422 = vpop.f32.mrb[0].mxu0
    %1423 = vmatprep.mubr.bf16.mxu0 %v1195
    %1424 = vmatmul.mubr.bf16.gmra.mrb[0].mxu0 %v1194
    %v1425 = vpop.f32.mrb[0].mxu0
    %v1426 = vadd.f32 0.0, %v1425
    %v1427 = vpop.f32.mrb[0].mxu0
    %v1428 = vpop.f32.mrb[0].mxu0
    %v1429 = vadd.f32 0.0, %v1428
    %v1430 = vpop.f32.mrb[0].mxu0
    %1431 = vmatprep.mubr.bf16.mxu0 %v1198
    %1432 = vmatmul.mubr.bf16.gmra.mrb[0].mxu0 %v1197
    %v1433 = vpop.f32.mrb[0].mxu0
    %v1434 = vadd.f32 0.0, %v1433
    %v1435 = vpop.f32.mrb[0].mxu0
    %v1436 = vpop.f32.mrb[0].mxu0
    %v1437 = vadd.f32 0.0, %v1436
    %v1438 = vpop.f32.mrb[0].mxu0
    %1439 = vmatprep.mubr.bf16.mxu0 %v1201
    %1440 = vmatmul.mubr.bf16.gmra.mrb[0].mxu0 %v1200
    %v1441 = vpop.f32.mrb[0].mxu0
    %v1442 = vadd.f32 0.0, %v1441
    %v1443 = vpop.f32.mrb[0].mxu0
    %v1444 = vpop.f32.mrb[0].mxu0
    %v1445 = vadd.f32 0.0, %v1444
    %v1446 = vpop.f32.mrb[0].mxu0
    %1447 = vmatprep.mubr.bf16.mxu0 %v1204
    %1448 = vmatmul.mubr.bf16.gmra.mrb[0].mxu0 %v1203
    %v1449 = vpop.f32.mrb[0].mxu0
    %v1450 = vadd.f32 0.0, %v1449
    %v1451 = vpop.f32.mrb[0].mxu0
    %v1452 = vpop.f32.mrb[0].mxu0
    %v1453 = vadd.f32 0.0, %v1452
    %v1454 = vpop.f32.mrb[0].mxu0
    %1455 = vmatprep.mubr.bf16.mxu0 %v1207
    %1456 = vmatmul.mubr.bf16.gmra.mrb[0].mxu0 %v1206
    %v1457 = vpop.f32.mrb[0].mxu0
    %v1458 = vadd.f32 0.0, %v1457
    %v1459 = vpop.f32.mrb[0].mxu0
    %v1460 = vpop.f32.mrb[0].mxu0
    %v1461 = vadd.f32 0.0, %v1460
    %v1462 = vpop.f32.mrb[0].mxu0
    %1463 = vmatprep.mubr.bf16.mxu0 %v1210
    %1464 = vmatmul.mubr.bf16.gmra.mrb[0].mxu0 %v1209
    %v1465 = vpop.f32.mrb[0].mxu0
    %v1466 = vadd.f32 0.0, %v1465
    %v1467 = vpop.f32.mrb[0].mxu0
    %v1468 = vpop.f32.mrb[0].mxu0
    %v1469 = vadd.f32 0.0, %v1468
    %v1470 = vpop.f32.mrb[0].mxu0
    %1471 = vmatprep.mubr.bf16.mxu0 %v1213
    %1472 = vmatmul.mubr.bf16.gmra.mrb[0].mxu0 %v1212
    %v1473 = vpop.f32.mrb[0].mxu0
    %v1474 = vadd.f32 0.0, %v1473
    %v1475 = vpop.f32.mrb[0].mxu0
    %v1476 = vpop.f32.mrb[0].mxu0
    %v1477 = vadd.f32 0.0, %v1476
    %v1478 = vpop.f32.mrb[0].mxu0
    %1479 = vdwg.mxu0
    %1480 = vmatprep.subr.bf16.mxu0 0
    %1481 = vmatpush1.bf16.msra.mxu0 %v1339
    %1482 = vmatprep.subr.bf16.mxu0 0
    %1483 = vmatpush1.bf16.msra.mxu0 %v1340
    %1484 = vmatprep.subr.bf16.mxu0 0
    %1485 = vmatpush1.bf16.msra.mxu0 0
    %1486 = vmatprep.subr.bf16.mxu0 0
    %1487 = vmatpush1.bf16.msra.mxu0 0
    %1488 = vmatprep.subr.bf16.mxu0 0
    %1489 = vmatpush1.bf16.msra.mxu0 0
    %1490 = vmatprep.subr.bf16.mxu0 0
    %1491 = vmatpush1.bf16.msra.mxu0 0
    %1492 = vmatprep.subr.bf16.mxu0 0
    %1493 = vmatpush1.bf16.msra.mxu0 0
    %1494 = vmatprep.subr.bf16.mxu0 0
    %1495 = vmatpush1.bf16.msra.mxu0 0
    %1496 = vmatprep.subr.bf16.mxu0 0
    %1497 = vmatpush1.bf16.msra.mxu0 0
    %1498 = vmatprep.subr.bf16.mxu0 0
    %1499 = vmatpush1.bf16.msra.mxu0 0
    %1500 = vmatprep.subr.bf16.mxu0 0
    %1501 = vmatpush1.bf16.msra.mxu0 0
    %1502 = vmatprep.subr.bf16.mxu0 0
    %1503 = vmatpush1.bf16.msra.mxu0 0
    %1504 = vmatprep.subr.bf16.mxu0 0
    %1505 = vmatpush1.bf16.msra.mxu0 0
    %1506 = vmatprep.subr.bf16.mxu0 0
    %1507 = vmatpush1.bf16.msra.mxu0 0
    %1508 = vmatprep.subr.bf16.mxu0 0
    %1509 = vmatpush1.bf16.msra.mxu0 0
    %1510 = vmatprep.subr.bf16.mxu0 0
    %1511 = vmatpush1.bf16.msra.mxu0 0
    %1512 = vmatprep.mubr.bf16.mxu0 0
    %1513 = vmatmul.mubr.bf16.gmra.mrb[0].mxu0 %v1360
    %v1514 = vpop.f32.mrb[0].mxu0
    %v1515 = vadd.f32 %v1418, %v1514
    %v1516 = vpop.f32.mrb[0].mxu0
    %v1517 = vpop.f32.mrb[0].mxu0
    %v1518 = vadd.f32 %v1421, %v1517
    %v1519 = vpop.f32.mrb[0].mxu0
    %1520 = vmatprep.mubr.bf16.mxu0 0
    %1521 = vmatmul.mubr.bf16.gmra.mrb[0].mxu0 %v1363
    %v1522 = vpop.f32.mrb[0].mxu0
    %v1523 = vadd.f32 %v1426, %v1522
    %v1524 = vpop.f32.mrb[0].mxu0
    %v1525 = vpop.f32.mrb[0].mxu0
    %v1526 = vadd.f32 %v1429, %v1525
    %v1527 = vpop.f32.mrb[0].mxu0
    %1528 = vmatprep.mubr.bf16.mxu0 0
    %1529 = vmatmul.mubr.bf16.gmra.mrb[0].mxu0 %v1366
    %v1530 = vpop.f32.mrb[0].mxu0
    %v1531 = vadd.f32 %v1434, %v1530
    %v1532 = vpop.f32.mrb[0].mxu0
    %v1533 = vpop.f32.mrb[0].mxu0
    %v1534 = vadd.f32 %v1437, %v1533
    %v1535 = vpop.f32.mrb[0].mxu0
    %1536 = vmatprep.mubr.bf16.mxu0 0
    %1537 = vmatmul.mubr.bf16.gmra.mrb[0].mxu0 %v1369
    %v1538 = vpop.f32.mrb[0].mxu0
    %v1539 = vadd.f32 %v1442, %v1538
    %v1540 = vpop.f32.mrb[0].mxu0
    %v1541 = vpop.f32.mrb[0].mxu0
    %v1542 = vadd.f32 %v1445, %v1541
    %v1543 = vpop.f32.mrb[0].mxu0
    %1544 = vmatprep.mubr.bf16.mxu0 0
    %1545 = vmatmul.mubr.bf16.gmra.mrb[0].mxu0 %v1372
    %v1546 = vpop.f32.mrb[0].mxu0
    %v1547 = vadd.f32 %v1450, %v1546
    %v1548 = vpop.f32.mrb[0].mxu0
    %v1549 = vpop.f32.mrb[0].mxu0
    %v1550 = vadd.f32 %v1453, %v1549
    %v1551 = vpop.f32.mrb[0].mxu0
    %1552 = vmatprep.mubr.bf16.mxu0 0
    %1553 = vmatmul.mubr.bf16.gmra.mrb[0].mxu0 %v1375
    %v1554 = vpop.f32.mrb[0].mxu0
    %v1555 = vadd.f32 %v1458, %v1554
    %v1556 = vpop.f32.mrb[0].mxu0
    %v1557 = vpop.f32.mrb[0].mxu0
    %v1558 = vadd.f32 %v1461, %v1557
    %v1559 = vpop.f32.mrb[0].mxu0
    %1560 = vmatprep.mubr.bf16.mxu0 0
    %1561 = vmatmul.mubr.bf16.gmra.mrb[0].mxu0 %v1378
    %v1562 = vpop.f32.mrb[0].mxu0
    %v1563 = vadd.f32 %v1466, %v1562
    %v1564 = vpop.f32.mrb[0].mxu0
    %v1565 = vpop.f32.mrb[0].mxu0
    %v1566 = vadd.f32 %v1469, %v1565
    %v1567 = vpop.f32.mrb[0].mxu0
    %1568 = vmatprep.mubr.bf16.mxu0 0
    %1569 = vmatmul.mubr.bf16.gmra.mrb[0].mxu0 %v1381
    %v1570 = vpop.f32.mrb[0].mxu0
    %v1571 = vadd.f32 %v1474, %v1570
    %v1572 = vpop.f32.mrb[0].mxu0
    %v1573 = vpop.f32.mrb[0].mxu0
    %v1574 = vadd.f32 %v1477, %v1573
    %v1575 = vpop.f32.mrb[0].mxu0
    %1576 = vdwg.mxu0
    %v1577 = vld [vmem:[%s6] sm:$0x1]
    %v1578 = vld [vmem:[%s7] sm:$0x1]
    %v1579 = vsel %vm220, %v1515, 0.0
    %v1580 = vsel %vm220, %v1518, 0.0
    %v1581 = vadd.f32 %v1579, %v1580
    %v1582 = vsel %vm220, %v1523, 0.0
    %v1583 = vadd.f32 %v1581, %v1582
    %v1584 = vsel %vm220, %v1526, 0.0
    %v1585 = vadd.f32 %v1583, %v1584
    %v1586 = vsel %vm220, %v1531, 0.0
    %v1587 = vadd.f32 %v1585, %v1586
    %v1588 = vsel %vm220, %v1534, 0.0
    %v1589 = vadd.f32 %v1587, %v1588
    %v1590 = vsel %vm220, %v1539, 0.0
    %v1591 = vadd.f32 %v1589, %v1590
    %v1592 = vsel %vm220, %v1542, 0.0
    %v1593 = vadd.f32 %v1591, %v1592
    %v1594 = vsel %vm220, %v1547, 0.0
    %v1595 = vadd.f32 %v1593, %v1594
    %v1596 = vsel %vm220, %v1550, 0.0
    %v1597 = vadd.f32 %v1595, %v1596
    %v1598 = vsel %vm220, %v1555, 0.0
    %v1599 = vadd.f32 %v1597, %v1598
    %v1600 = vsel %vm220, %v1558, 0.0
    %v1601 = vadd.f32 %v1599, %v1600
    %v1602 = vsel %vm220, %v1563, 0.0
    %v1603 = vadd.f32 %v1601, %v1602
    %v1604 = vsel %vm220, %v1566, 0.0
    %v1605 = vadd.f32 %v1603, %v1604
    %v1606 = vsel %vm220, %v1571, 0.0
    %v1607 = vadd.f32 %v1605, %v1606
    %v1608 = vsel %vm220, %v1574, 0.0
    %v1609 = vadd.f32 %v1607, %v1608
    %v1610 = vrot.slane %v1609, 4
    %v1611 = vadd.f32 %v1609, %v1610
    %v1612 = vrot.slane %v1611, 2
    %v1613 = vadd.f32 %v1611, %v1612
    %v1614 = vrot.slane %v1613, 1
    %v1615 = vadd.f32 %v1613, %v1614
    %v1616 = vmul.f32 %v1515, %v1515
    %v1617 = vmul.f32 %v1518, %v1518
    %v1618 = vmul.f32 %v1523, %v1523
    %v1619 = vmul.f32 %v1526, %v1526
    %v1620 = vmul.f32 %v1531, %v1531
    %v1621 = vmul.f32 %v1534, %v1534
    %v1622 = vmul.f32 %v1539, %v1539
    %v1623 = vmul.f32 %v1542, %v1542
    %v1624 = vmul.f32 %v1547, %v1547
    %v1625 = vmul.f32 %v1550, %v1550
    %v1626 = vmul.f32 %v1555, %v1555
    %v1627 = vmul.f32 %v1558, %v1558
    %v1628 = vmul.f32 %v1563, %v1563
    %v1629 = vmul.f32 %v1566, %v1566
    %v1630 = vmul.f32 %v1571, %v1571
    %v1631 = vmul.f32 %v1574, %v1574
    %v1632 = vsel %vm220, %v1616, 0.0
    %v1633 = vsel %vm220, %v1617, 0.0
    %v1634 = vadd.f32 %v1632, %v1633
    %v1635 = vsel %vm220, %v1618, 0.0
    %v1636 = vadd.f32 %v1634, %v1635
    %v1637 = vsel %vm220, %v1619, 0.0
    %v1638 = vadd.f32 %v1636, %v1637
    %v1639 = vsel %vm220, %v1620, 0.0
    %v1640 = vadd.f32 %v1638, %v1639
    %v1641 = vsel %vm220, %v1621, 0.0
    %v1642 = vadd.f32 %v1640, %v1641
    %v1643 = vsel %vm220, %v1622, 0.0
    %v1644 = vadd.f32 %v1642, %v1643
    %v1645 = vsel %vm220, %v1623, 0.0
    %v1646 = vadd.f32 %v1644, %v1645
    %v1647 = vsel %vm220, %v1624, 0.0
    %v1648 = vadd.f32 %v1646, %v1647
    %v1649 = vsel %vm220, %v1625, 0.0
    %v1650 = vadd.f32 %v1648, %v1649
    %v1651 = vsel %vm220, %v1626, 0.0
    %v1652 = vadd.f32 %v1650, %v1651
    %v1653 = vsel %vm220, %v1627, 0.0
    %v1654 = vadd.f32 %v1652, %v1653
    %v1655 = vsel %vm220, %v1628, 0.0
    %v1656 = vadd.f32 %v1654, %v1655
    %v1657 = vsel %vm220, %v1629, 0.0
    %v1658 = vadd.f32 %v1656, %v1657
    %v1659 = vsel %vm220, %v1630, 0.0
    %v1660 = vadd.f32 %v1658, %v1659
    %v1661 = vsel %vm220, %v1631, 0.0
    %v1662 = vadd.f32 %v1660, %v1661
    %v1663 = vrot.slane %v1662, 4
    %v1664 = vadd.f32 %v1662, %v1663
    %v1665 = vrot.slane %v1664, 2
    %v1666 = vadd.f32 %v1664, %v1665
    %v1667 = vrot.slane %v1666, 1
    %v1668 = vadd.f32 %v1666, %v1667
    %v1669 = vmul.f32 %v1615, 0.0078125
    %v1670 = vmul.f32 %v1668, 0.0078125
    %v1671 = vmul.f32 %v1669, %v1669
    %v1672 = vsub.f32 %v1670, %v1671
    %v1673 = vsub.f32 %v1515, %v1669
    %v1674 = vsub.f32 %v1518, %v1669
    %v1675 = vsub.f32 %v1523, %v1669
    %v1676 = vsub.f32 %v1526, %v1669
    %v1677 = vsub.f32 %v1531, %v1669
    %v1678 = vsub.f32 %v1534, %v1669
    %v1679 = vsub.f32 %v1539, %v1669
    %v1680 = vsub.f32 %v1542, %v1669
    %v1681 = vsub.f32 %v1547, %v1669
    %v1682 = vsub.f32 %v1550, %v1669
    %v1683 = vsub.f32 %v1555, %v1669
    %v1684 = vsub.f32 %v1558, %v1669
    %v1685 = vsub.f32 %v1563, %v1669
    %v1686 = vsub.f32 %v1566, %v1669
    %v1687 = vsub.f32 %v1571, %v1669
    %v1688 = vsub.f32 %v1574, %v1669
    %v1689 = vadd.f32 %v1672, 1e-05
    %v1690 = vrsqrt.pop %v1689
    %v1691 = vmul.f32 %v1673, %v1690
    %v1692 = vmul.f32 %v1674, %v1690
    %v1693 = vmul.f32 %v1675, %v1690
    %v1694 = vmul.f32 %v1676, %v1690
    %v1695 = vmul.f32 %v1677, %v1690
    %v1696 = vmul.f32 %v1678, %v1690
    %v1697 = vmul.f32 %v1679, %v1690
    %v1698 = vmul.f32 %v1680, %v1690
    %v1699 = vmul.f32 %v1681, %v1690
    %v1700 = vmul.f32 %v1682, %v1690
    %v1701 = vmul.f32 %v1683, %v1690
    %v1702 = vmul.f32 %v1684, %v1690
    %v1703 = vmul.f32 %v1685, %v1690
    %v1704 = vmul.f32 %v1686, %v1690
    %v1705 = vmul.f32 %v1687, %v1690
    %v1706 = vmul.f32 %v1688, %v1690
    %v1708 = vlaneseq
    %v1709 = vshrl.u32 %v1708, 7
    %v1710 = vsub.s32 0, %v1709
    %v1711 = vrot.slane %v1577, %v1710
    %v1713 = vmul.f32 %v1691, %v1711
    %v1714 = vmul.f32 %v1692, %v1711
    %v1715 = vmul.f32 %v1693, %v1711
    %v1716 = vmul.f32 %v1694, %v1711
    %v1717 = vmul.f32 %v1695, %v1711
    %v1718 = vmul.f32 %v1696, %v1711
    %v1719 = vmul.f32 %v1697, %v1711
    %v1720 = vmul.f32 %v1698, %v1711
    %v1721 = vmul.f32 %v1699, %v1711
    %v1722 = vmul.f32 %v1700, %v1711
    %v1723 = vmul.f32 %v1701, %v1711
    %v1724 = vmul.f32 %v1702, %v1711
    %v1725 = vmul.f32 %v1703, %v1711
    %v1726 = vmul.f32 %v1704, %v1711
    %v1727 = vmul.f32 %v1705, %v1711
    %v1728 = vmul.f32 %v1706, %v1711
    %v1730 = vlaneseq
    %v1731 = vshrl.u32 %v1730, 7
    %v1732 = vsub.s32 0, %v1731
    %v1733 = vrot.slane %v1578, %v1732
    %v1735 = vadd.f32 %v1713, %v1733
    %v1736 = vadd.f32 %v1714, %v1733
    %v1737 = vadd.f32 %v1715, %v1733
    %v1738 = vadd.f32 %v1716, %v1733
    %v1739 = vadd.f32 %v1717, %v1733
    %v1740 = vadd.f32 %v1718, %v1733
    %v1741 = vadd.f32 %v1719, %v1733
    %v1742 = vadd.f32 %v1720, %v1733
    %v1743 = vadd.f32 %v1721, %v1733
    %v1744 = vadd.f32 %v1722, %v1733
    %v1745 = vadd.f32 %v1723, %v1733
    %v1746 = vadd.f32 %v1724, %v1733
    %v1747 = vadd.f32 %v1725, %v1733
    %v1748 = vadd.f32 %v1726, %v1733
    %v1749 = vadd.f32 %v1727, %v1733
    %v1750 = vadd.f32 %v1728, %v1733
    %v1751 = vmax.f32 %v1735, 0.0
    %v1752 = vmax.f32 %v1736, 0.0
    %v1753 = vmax.f32 %v1737, 0.0
    %v1754 = vmax.f32 %v1738, 0.0
    %v1755 = vmax.f32 %v1739, 0.0
    %v1756 = vmax.f32 %v1740, 0.0
    %v1757 = vmax.f32 %v1741, 0.0
    %v1758 = vmax.f32 %v1742, 0.0
    %v1759 = vmax.f32 %v1743, 0.0
    %v1760 = vmax.f32 %v1744, 0.0
    %v1761 = vmax.f32 %v1745, 0.0
    %v1762 = vmax.f32 %v1746, 0.0
    %v1763 = vmax.f32 %v1747, 0.0
    %v1764 = vmax.f32 %v1748, 0.0
    %v1765 = vmax.f32 %v1749, 0.0
    %v1766 = vmax.f32 %v1750, 0.0
    %v1767 = vld [vmem:[%s8] sm:$0xf]
    %v1768 = vld [vmem:[%s8 + $0x4] sm:$0xf]
    %v1769 = vld [vmem:[%s8 + $0x8] sm:$0xf]
    %v1770 = vld [vmem:[%s8 + $0xc] sm:$0xf]
    %v1771 = vld [vmem:[%s8 + $0x10] sm:$0xf]
    %v1772 = vld [vmem:[%s8 + $0x14] sm:$0xf]
    %v1773 = vld [vmem:[%s8 + $0x18] sm:$0xf]
    %v1774 = vld [vmem:[%s8 + $0x1c] sm:$0xf]
    %v1775 = vpack.c.bf16 %v1752, %v1751
    %v1776 = vpack.c.bf16 %v1754, %v1753
    %v1777 = vpack.c.bf16 %v1756, %v1755
    %v1778 = vpack.c.bf16 %v1758, %v1757
    %v1779 = vpack.c.bf16 %v1760, %v1759
    %v1780 = vpack.c.bf16 %v1762, %v1761
    %v1781 = vpack.c.bf16 %v1764, %v1763
    %v1782 = vpack.c.bf16 %v1766, %v1765
    %v1791 = vunpack.c.l.b16 %v1767
    %v1792 = vunpack.c.l.b16 %v1768
    %v1793 = vunpack.c.l.b16 %v1769
    %v1794 = vunpack.c.l.b16 %v1770
    %v1795 = vunpack.c.l.b16 %v1771
    %v1796 = vunpack.c.l.b16 %v1772
    %v1797 = vunpack.c.l.b16 %v1773
    %v1798 = vunpack.c.l.b16 %v1774
    %v1799 = vpack.c.b16 %v1792, %v1791
    %v1800 = vpack.c.b16 %v1794, %v1793
    %v1801 = vpack.c.b16 %v1796, %v1795
    %v1802 = vpack.c.b16 %v1798, %v1797
    %v1804 = vsel %vm220, %v1799, 0
    %v1807 = vsel %vm220, %v1800, 0
    %v1810 = vsel %vm220, %v1801, 0
    %v1813 = vsel %vm220, %v1802, 0
    %v1816 = vsel %vm220, %v1775, 0
    %v1819 = vsel %vm220, %v1776, 0
    %v1822 = vsel %vm220, %v1777, 0
    %v1825 = vsel %vm220, %v1778, 0
    %v1828 = vsel %vm220, %v1779, 0
    %v1831 = vsel %vm220, %v1780, 0
    %v1834 = vsel %vm220, %v1781, 0
    %v1837 = vsel %vm220, %v1782, 0
    %1839 = vmatprep.subr.bf16.mxu0 0
    %1840 = vmatpush1.bf16.xpose.msra.mxu0 %v1816
    %1841 = vmatprep.subr.bf16.mxu0 0
    %1842 = vmatpush1.bf16.xpose.msra.mxu0 %v1819
    %1843 = vmatprep.subr.bf16.mxu0 0
    %1844 = vmatpush1.bf16.xpose.msra.mxu0 %v1822
    %1845 = vmatprep.subr.bf16.mxu0 0
    %1846 = vmatpush1.bf16.xpose.msra.mxu0 %v1825
    %1847 = vmatprep.subr.bf16.mxu0 0
    %1848 = vmatpush1.bf16.xpose.msra.mxu0 %v1828
    %1849 = vmatprep.subr.bf16.mxu0 0
    %1850 = vmatpush1.bf16.xpose.msra.mxu0 %v1831
    %1851 = vmatprep.subr.bf16.mxu0 0
    %1852 = vmatpush1.bf16.xpose.msra.mxu0 %v1834
    %1853 = vmatprep.subr.bf16.mxu0 0
    %1854 = vmatpush1.bf16.xpose.msra.mxu0 %v1837
    %1855 = vmatprep.subr.bf16.mxu0 0
    %1856 = vmatpush1.bf16.xpose.msra.mxu0 0
    %1857 = vmatprep.subr.bf16.mxu0 0
    %1858 = vmatpush1.bf16.xpose.msra.mxu0 0
    %1859 = vmatprep.subr.bf16.mxu0 0
    %1860 = vmatpush1.bf16.xpose.msra.mxu0 0
    %1861 = vmatprep.subr.bf16.mxu0 0
    %1862 = vmatpush1.bf16.xpose.msra.mxu0 0
    %1863 = vmatprep.subr.bf16.mxu0 0
    %1864 = vmatpush1.bf16.xpose.msra.mxu0 0
    %1865 = vmatprep.subr.bf16.mxu0 0
    %1866 = vmatpush1.bf16.xpose.msra.mxu0 0
    %1867 = vmatprep.subr.bf16.mxu0 0
    %1868 = vmatpush1.bf16.xpose.msra.mxu0 0
    %1869 = vmatprep.subr.bf16.mxu0 0
    %1870 = vmatpush1.bf16.xpose.msra.mxu0 0
    %1871 = vmatprep.mubr.bf16.mxu0 0
    %1872 = vmatmul.mubr.bf16.gmra.mrb[0].mxu0 %v1804
    %v1873 = vpop.f32.mrb[0].mxu0
    %v1874 = vadd.f32 0.0, %v1873
    %v1875 = vpop.f32.mrb[0].mxu0
    %v1876 = vpop.f32.mrb[0].mxu0
    %v1877 = vadd.f32 0.0, %v1876
    %v1878 = vpop.f32.mrb[0].mxu0
    %1879 = vmatprep.mubr.bf16.mxu0 0
    %1880 = vmatmul.mubr.bf16.gmra.mrb[0].mxu0 %v1807
    %v1881 = vpop.f32.mrb[0].mxu0
    %v1882 = vadd.f32 0.0, %v1881
    %v1883 = vpop.f32.mrb[0].mxu0
    %v1884 = vpop.f32.mrb[0].mxu0
    %v1885 = vadd.f32 0.0, %v1884
    %v1886 = vpop.f32.mrb[0].mxu0
    %1887 = vmatprep.mubr.bf16.mxu0 0
    %1888 = vmatmul.mubr.bf16.gmra.mrb[0].mxu0 %v1810
    %v1889 = vpop.f32.mrb[0].mxu0
    %v1890 = vadd.f32 0.0, %v1889
    %v1891 = vpop.f32.mrb[0].mxu0
    %v1892 = vpop.f32.mrb[0].mxu0
    %v1893 = vadd.f32 0.0, %v1892
    %v1894 = vpop.f32.mrb[0].mxu0
    %1895 = vmatprep.mubr.bf16.mxu0 0
    %1896 = vmatmul.mubr.bf16.gmra.mrb[0].mxu0 %v1813
    %v1897 = vpop.f32.mrb[0].mxu0
    %v1898 = vadd.f32 0.0, %v1897
    %v1899 = vpop.f32.mrb[0].mxu0
    %v1900 = vpop.f32.mrb[0].mxu0
    %v1901 = vadd.f32 0.0, %v1900
    %v1902 = vpop.f32.mrb[0].mxu0
    %1903 = vdwg.mxu0
    %v1904 = vld [vmem:[%s9] sm:$0xff]
    %v1905 = vld [vmem:[%s9 + $0x8] sm:$0xff]
    %v1906 = vld [vmem:[%s9 + $0x10] sm:$0xff]
    %v1907 = vld [vmem:[%s9 + $0x18] sm:$0xff]
    %v1908 = vld [vmem:[%s9 + $0x20] sm:$0xff]
    %v1909 = vld [vmem:[%s9 + $0x28] sm:$0xff]
    %v1910 = vld [vmem:[%s9 + $0x30] sm:$0xff]
    %v1911 = vld [vmem:[%s9 + $0x38] sm:$0xff]
    %v1912 = vld [vmem:[%s10] sm:$0xff]
    %v1913 = vld [vmem:[%s10 + $0x8] sm:$0xff]
    %v1914 = vld [vmem:[%s10 + $0x10] sm:$0xff]
    %v1915 = vld [vmem:[%s10 + $0x18] sm:$0xff]
    %v1916 = vld [vmem:[%s10 + $0x20] sm:$0xff]
    %v1917 = vld [vmem:[%s10 + $0x28] sm:$0xff]
    %v1918 = vld [vmem:[%s10 + $0x30] sm:$0xff]
    %v1919 = vld [vmem:[%s10 + $0x38] sm:$0xff]
    %1920 = vadd.xlane.f32.xlu0 %v1874
    %v1921 = vpop.xlane.xlu0 %1920
    %1922 = vadd.xlane.f32.xlu0 %v1877
    %v1923 = vpop.xlane.xlu0 %1922
    %1924 = vadd.xlane.f32.xlu0 %v1882
    %v1925 = vpop.xlane.xlu0 %1924
    %1926 = vadd.xlane.f32.xlu0 %v1885
    %v1927 = vpop.xlane.xlu0 %1926
    %1928 = vadd.xlane.f32.xlu0 %v1890
    %v1929 = vpop.xlane.xlu0 %1928
    %1930 = vadd.xlane.f32.xlu0 %v1893
    %v1931 = vpop.xlane.xlu0 %1930
    %1932 = vadd.xlane.f32.xlu0 %v1898
    %v1933 = vpop.xlane.xlu0 %1932
    %1934 = vadd.xlane.f32.xlu0 %v1901
    %v1935 = vpop.xlane.xlu0 %1934
    %v1936 = vmul.f32 %v1874, %v1874
    %v1937 = vmul.f32 %v1877, %v1877
    %v1938 = vmul.f32 %v1882, %v1882
    %v1939 = vmul.f32 %v1885, %v1885
    %v1940 = vmul.f32 %v1890, %v1890
    %v1941 = vmul.f32 %v1893, %v1893
    %v1942 = vmul.f32 %v1898, %v1898
    %v1943 = vmul.f32 %v1901, %v1901
    %1944 = vadd.xlane.f32.xlu0 %v1936
    %v1945 = vpop.xlane.xlu0 %1944
    %1946 = vadd.xlane.f32.xlu0 %v1937
    %v1947 = vpop.xlane.xlu0 %1946
    %1948 = vadd.xlane.f32.xlu0 %v1938
    %v1949 = vpop.xlane.xlu0 %1948
    %1950 = vadd.xlane.f32.xlu0 %v1939
    %v1951 = vpop.xlane.xlu0 %1950
    %1952 = vadd.xlane.f32.xlu0 %v1940
    %v1953 = vpop.xlane.xlu0 %1952
    %1954 = vadd.xlane.f32.xlu0 %v1941
    %v1955 = vpop.xlane.xlu0 %1954
    %1956 = vadd.xlane.f32.xlu0 %v1942
    %v1957 = vpop.xlane.xlu0 %1956
    %1958 = vadd.xlane.f32.xlu0 %v1943
    %v1959 = vpop.xlane.xlu0 %1958
    %v1960 = vmul.f32 %v1921, 0.0078125
    %v1961 = vmul.f32 %v1923, 0.0078125
    %v1962 = vmul.f32 %v1925, 0.0078125
    %v1963 = vmul.f32 %v1927, 0.0078125
    %v1964 = vmul.f32 %v1929, 0.0078125
    %v1965 = vmul.f32 %v1931, 0.0078125
    %v1966 = vmul.f32 %v1933, 0.0078125
    %v1967 = vmul.f32 %v1935, 0.0078125
    %v1968 = vmul.f32 %v1945, 0.0078125
    %v1969 = vmul.f32 %v1947, 0.0078125
    %v1970 = vmul.f32 %v1949, 0.0078125
    %v1971 = vmul.f32 %v1951, 0.0078125
    %v1972 = vmul.f32 %v1953, 0.0078125
    %v1973 = vmul.f32 %v1955, 0.0078125
    %v1974 = vmul.f32 %v1957, 0.0078125
    %v1975 = vmul.f32 %v1959, 0.0078125
    %v1976 = vmul.f32 %v1960, %v1960
    %v1977 = vmul.f32 %v1961, %v1961
    %v1978 = vmul.f32 %v1962, %v1962
    %v1979 = vmul.f32 %v1963, %v1963
    %v1980 = vmul.f32 %v1964, %v1964
    %v1981 = vmul.f32 %v1965, %v1965
    %v1982 = vmul.f32 %v1966, %v1966
    %v1983 = vmul.f32 %v1967, %v1967
    %v1984 = vsub.f32 %v1968, %v1976
    %v1985 = vsub.f32 %v1969, %v1977
    %v1986 = vsub.f32 %v1970, %v1978
    %v1987 = vsub.f32 %v1971, %v1979
    %v1988 = vsub.f32 %v1972, %v1980
    %v1989 = vsub.f32 %v1973, %v1981
    %v1990 = vsub.f32 %v1974, %v1982
    %v1991 = vsub.f32 %v1975, %v1983
    %v1992 = vsub.f32 %v1874, %v1960
    %v1993 = vsub.f32 %v1877, %v1961
    %v1994 = vsub.f32 %v1882, %v1962
    %v1995 = vsub.f32 %v1885, %v1963
    %v1996 = vsub.f32 %v1890, %v1964
    %v1997 = vsub.f32 %v1893, %v1965
    %v1998 = vsub.f32 %v1898, %v1966
    %v1999 = vsub.f32 %v1901, %v1967
    %v2000 = vadd.f32 %v1984, 1e-05
    %v2001 = vadd.f32 %v1985, 1e-05
    %v2002 = vadd.f32 %v1986, 1e-05
    %v2003 = vadd.f32 %v1987, 1e-05
    %v2004 = vadd.f32 %v1988, 1e-05
    %v2005 = vadd.f32 %v1989, 1e-05
    %v2006 = vadd.f32 %v1990, 1e-05
    %v2007 = vadd.f32 %v1991, 1e-05
    %v2008 = vrsqrt.pop %v2000
    %v2009 = vrsqrt.pop %v2001
    %v2010 = vrsqrt.pop %v2002
    %v2011 = vrsqrt.pop %v2003
    %v2012 = vrsqrt.pop %v2004
    %v2013 = vrsqrt.pop %v2005
    %v2014 = vrsqrt.pop %v2006
    %v2015 = vrsqrt.pop %v2007
    %v2016 = vmul.f32 %v1992, %v2008
    %v2017 = vmul.f32 %v1993, %v2009
    %v2018 = vmul.f32 %v1994, %v2010
    %v2019 = vmul.f32 %v1995, %v2011
    %v2020 = vmul.f32 %v1996, %v2012
    %v2021 = vmul.f32 %v1997, %v2013
    %v2022 = vmul.f32 %v1998, %v2014
    %v2023 = vmul.f32 %v1999, %v2015
    %2025 = vset.pattern.permute.xlu0 0
    %2026 = vperm.xlu0 %2025, %v1904
    %v2027 = vpop.permute.xlu0 %2026
    %2030 = vset.pattern.permute.xlu0 0
    %2031 = vperm.xlu0 %2030, %v1905
    %v2032 = vpop.permute.xlu0 %2031
    %2035 = vset.pattern.permute.xlu0 0
    %2036 = vperm.xlu0 %2035, %v1906
    %v2037 = vpop.permute.xlu0 %2036
    %2040 = vset.pattern.permute.xlu0 0
    %2041 = vperm.xlu0 %2040, %v1907
    %v2042 = vpop.permute.xlu0 %2041
    %2045 = vset.pattern.permute.xlu0 0
    %2046 = vperm.xlu0 %2045, %v1908
    %v2047 = vpop.permute.xlu0 %2046
    %2050 = vset.pattern.permute.xlu0 0
    %2051 = vperm.xlu0 %2050, %v1909
    %v2052 = vpop.permute.xlu0 %2051
    %2055 = vset.pattern.permute.xlu0 0
    %2056 = vperm.xlu0 %2055, %v1910
    %v2057 = vpop.permute.xlu0 %2056
    %2060 = vset.pattern.permute.xlu0 0
    %2061 = vperm.xlu0 %2060, %v1911
    %v2062 = vpop.permute.xlu0 %2061
    %v2064 = vmul.f32 %v2016, %v2027
    %v2065 = vmul.f32 %v2017, %v2032
    %v2066 = vmul.f32 %v2018, %v2037
    %v2067 = vmul.f32 %v2019, %v2042
    %v2068 = vmul.f32 %v2020, %v2047
    %v2069 = vmul.f32 %v2021, %v2052
    %v2070 = vmul.f32 %v2022, %v2057
    %v2071 = vmul.f32 %v2023, %v2062
    %2073 = vset.pattern.permute.xlu0 0
    %2074 = vperm.xlu0 %2073, %v1912
    %v2075 = vpop.permute.xlu0 %2074
    %2078 = vset.pattern.permute.xlu0 0
    %2079 = vperm.xlu0 %2078, %v1913
    %v2080 = vpop.permute.xlu0 %2079
    %2083 = vset.pattern.permute.xlu0 0
    %2084 = vperm.xlu0 %2083, %v1914
    %v2085 = vpop.permute.xlu0 %2084
    %2088 = vset.pattern.permute.xlu0 0
    %2089 = vperm.xlu0 %2088, %v1915
    %v2090 = vpop.permute.xlu0 %2089
    %2093 = vset.pattern.permute.xlu0 0
    %2094 = vperm.xlu0 %2093, %v1916
    %v2095 = vpop.permute.xlu0 %2094
    %2098 = vset.pattern.permute.xlu0 0
    %2099 = vperm.xlu0 %2098, %v1917
    %v2100 = vpop.permute.xlu0 %2099
    %2103 = vset.pattern.permute.xlu0 0
    %2104 = vperm.xlu0 %2103, %v1918
    %v2105 = vpop.permute.xlu0 %2104
    %2108 = vset.pattern.permute.xlu0 0
    %2109 = vperm.xlu0 %2108, %v1919
    %v2110 = vpop.permute.xlu0 %2109
    %v2112 = vadd.f32 %v2064, %v2075
    %v2113 = vadd.f32 %v2065, %v2080
    %v2114 = vadd.f32 %v2066, %v2085
    %v2115 = vadd.f32 %v2067, %v2090
    %v2116 = vadd.f32 %v2068, %v2095
    %v2117 = vadd.f32 %v2069, %v2100
    %v2118 = vadd.f32 %v2070, %v2105
    %v2119 = vadd.f32 %v2071, %v2110
    %v2120 = vld [vmem:[%s1] sm:$0xff]
    %v2121 = vld [vmem:[%s1 + $0x8] sm:$0xff]
    %v2122 = vld [vmem:[%s1 + $0x10] sm:$0xff]
    %v2123 = vld [vmem:[%s1 + $0x18] sm:$0xff]
    %v2124 = vld [vmem:[%s1 + $0x20] sm:$0xff]
    %v2125 = vld [vmem:[%s1 + $0x28] sm:$0xff]
    %v2126 = vld [vmem:[%s1 + $0x30] sm:$0xff]
    %v2127 = vld [vmem:[%s1 + $0x38] sm:$0xff]
    %v2128 = vadd.f32 %v2112, %v2120
    %v2129 = vadd.f32 %v2113, %v2121
    %v2130 = vadd.f32 %v2114, %v2122
    %v2131 = vadd.f32 %v2115, %v2123
    %v2132 = vadd.f32 %v2116, %v2124
    %v2133 = vadd.f32 %v2117, %v2125
    %v2134 = vadd.f32 %v2118, %v2126
    %v2135 = vadd.f32 %v2119, %v2127
    %v2136 = vmax.f32 %v2128, 0.0
    %v2137 = vmax.f32 %v2129, 0.0
    %v2138 = vmax.f32 %v2130, 0.0
    %v2139 = vmax.f32 %v2131, 0.0
    %v2140 = vmax.f32 %v2132, 0.0
    %v2141 = vmax.f32 %v2133, 0.0
    %v2142 = vmax.f32 %v2134, 0.0
    %v2143 = vmax.f32 %v2135, 0.0
    %2144 = vst [vmem:[#allocation4] sm:$0xff] %v2136
    %2145 = vst [vmem:[#allocation4 + $0x8] sm:$0xff] %v2137
    %2146 = vst [vmem:[#allocation4 + $0x10] sm:$0xff] %v2138
    %2147 = vst [vmem:[#allocation4 + $0x18] sm:$0xff] %v2139
    %2148 = vst [vmem:[#allocation4 + $0x20] sm:$0xff] %v2140
    %2149 = vst [vmem:[#allocation4 + $0x28] sm:$0xff] %v2141
    %2150 = vst [vmem:[#allocation4 + $0x30] sm:$0xff] %v2142
    %2151 = vst [vmem:[#allocation4 + $0x38] sm:$0xff] %v2143
    // Predicated region
    $region46: #{tpu_custom_call.1} parent=1 // pred_check
      _
    $region47: #{tpu_custom_call.1} parent=1 // pred_check_branch
      %2153 = sbr.rel (0) target = $region49
    $region48: #{tpu_custom_call.1} parent=1 // pred_region
      %s2155 = ssub.s32 1024, 1024
      %2156 = vsyncadd [#allocation5], %s2155
      %s2157 = sshll.u32 [#allocation4], 4
      %s2158 = int_to_ptr.vmem [resolvable:$true] %s2157
      %2163 = dma.vmem_to_hbm [thread:$0]  %s2158, 1024, %s11, [#allocation5], 128, 128, 8
    $region49: #{tpu_custom_call.1} parent=1 // pred_fallthru
      _
    // Predicated region
    $region50: #{tpu_custom_call.1} parent=1 // pred_check
      _
    $region51: #{tpu_custom_call.1} parent=1 // pred_check_branch
      %2165 = sbr.rel (0) target = $region53
    $region52: #{tpu_custom_call.1} parent=1 // pred_region
      %2166 = dma.done [#allocation5], 1024
    $region53: #{tpu_custom_call.1} parent=1 // pred_fallthru
      _
    %2167 = vsyncpa [#allocation5], 1

</llo_original>
